<compile_context>
chip_gen: v7x
topology: tpu7x:2x2x1
jax: 0.10.0
libtpu: 0.0.40
codegen_flags: <defaults>
</compile_context>

<pallas_src>
import functools

import numpy as np
import jax
import jax.numpy as jnp
from jax.experimental import pallas as pl
from jax.experimental.pallas import tpu as pltpu

# LRN hyper-parameters fixed by the module: LocalResponseNorm(size=4, alpha=1e-4, beta=0.75, k=2)
LRN_SIZE, LRN_ALPHA, LRN_BETA, LRN_K = 4, 1e-4, 0.75, 2.0
POOL_FACTORS = (10, 6, 3, 2, 1)  # channel order of the torch.cat (after the passthrough channel)


def _lrn(a):
    """LocalResponseNorm(size=4, ...) over the channel (lane) axis of a (TB, C) slab.

    Windowed sum of squares over channels [j-2, j+1] (zero padded, matching torch's
    padding) via XLU lane rolls + boundary masks -- no O(C^2) band matmul."""
    c = a.shape[-1]
    sq = a * a
    col = jax.lax.broadcasted_iota(jnp.int32, sq.shape, 1)
    zero = jnp.zeros_like(sq)
    div = sq                                                               # offset 0
    div = div + jnp.where(col >= 1, pltpu.roll(sq, 1, axis=1), zero)       # offset -1
    div = div + jnp.where(col >= 2, pltpu.roll(sq, 2, axis=1), zero)       # offset -2
    div = div + jnp.where(col < c - 1, pltpu.roll(sq, c - 1, axis=1), zero)  # offset +1
    div = div * (1.0 / LRN_SIZE)
    # (k + alpha*div)^(-beta) written as exp(-beta*log(.)) -- EUP ops only, no powf lowering.
    return a * jnp.exp(-LRN_BETA * jnp.log(LRN_K + LRN_ALPHA * div))


def textnet_kernel(bit, x_ref, eps_ref, p_ref, ws_ref, wx_ref, wf_ref, bf1_ref,
                   wmu_ref, bmu_ref, wsig_ref, bsig_ref, wc_ref, bc_ref,
                   whl_ref, bhl_ref,
                   fea_ref, hl_ref, pred_ref, mu_ref, logsig_ref):
    f32 = jnp.float32
    x = x_ref[...]                                                        # (TB, D)

    # Multi-scale branch: AvgPool([1,5k]) for all five factors folded into one (D, Ltot)
    # pooling matrix; the per-branch 1x1 scalar convs are a per-bin column scale + ReLU.
    # The nearest-interp back to D and the feature conv's interp-channel weights were
    # folded offline into wf_ref, so no length-D expansion ever happens.
    pooled = jnp.dot(x, p_ref[...], preferred_element_type=f32)           # (TB, Ltot)
    interp = jnp.maximum(pooled * ws_ref[...], 0.0)                       # ReLU(w_k * pooled)

    # feature[0]: Conv2d(6 -> F1, kernel=(1, D)) == passthrough-channel matmul plus the
    # folded interp-channel matmul.
    h1 = (jnp.dot(x, wx_ref[...], preferred_element_type=f32)
          + jnp.dot(interp, wf_ref[...], preferred_element_type=f32)
          + bf1_ref[...])
    h1 = jnp.maximum(h1, 0.0)                                             # ReLU -> (TB, F1)

    # feature[2]: LocalResponseNorm(size=4)
    n1 = _lrn(h1)

    # feature[3..4]: Conv2d(F1 -> 2*SE, 1x1) + ReLU, split into the mu / log_sigma halves.
    mu = jnp.maximum(
        jnp.dot(n1, wmu_ref[...], preferred_element_type=f32) + bmu_ref[...], 0.0)
    logsig = jnp.maximum(
        jnp.dot(n1, wsig_ref[...], preferred_element_type=f32) + bsig_ref[...], 0.0)

    # Reparameterisation: fea_T = ReLU(eps * exp(0.5*log_sigma) + mu)
    fea = jnp.maximum(eps_ref[...] * jnp.exp(0.5 * logsig) + mu, 0.0)     # (TB, SE)

    # cross_feature: Conv2d(SE -> SE, 1x1) with bias, applied to fea_T.
    pred = jnp.dot(fea, wc_ref[...], preferred_element_type=f32) + bc_ref[...]

    # norm = LRN(fea_T)
    norm = _lrn(fea)

    # Fused hash + label heads: one lane-dense matmul; tanh on the first `bit` columns,
    # sigmoid on the remaining numClass columns (selected with an iota mask, no slicing).
    hl = jnp.dot(norm, whl_ref[...], preferred_element_type=f32) + bhl_ref[...]
    col = jax.lax.broadcasted_iota(jnp.int32, hl.shape, 1)
    hl_ref[...] = jnp.where(col < bit, jnp.tanh(hl), 1.0 / (1.0 + jnp.exp(-hl)))

    fea_ref[...] = fea
    pred_ref[...] = pred
    mu_ref[...] = mu
    logsig_ref[...] = logsig


def prepare_kernel_params(params, dim_txt, se):
    """Fold the torch-layout parameters into matmul-friendly operands (pure parameter /
    layout plumbing, done once; no per-example compute)."""
    D = dim_txt
    wf1 = params["wf1"]                                  # (F1, 6, D) Conv2d(6->F1,(1,D)) weight
    f1 = wf1.shape[0]

    p_blocks, scale_blocks, wfold_blocks = [], [], []
    for idx, k in enumerate(POOL_FACTORS):
        kw = 5 * k
        L = D // kw
        i = np.arange(D)[:, None]
        b = np.arange(L)[None, :]
        # AvgPool2d([1, kw], stride=[1, kw]) as a (D, L) matrix (trailing remainder dropped).
        p_blocks.append(jnp.asarray((i >= b * kw) & (i < (b + 1) * kw), jnp.float32) / kw)
        # The branch's 1x1 conv (scalar weight, no bias) becomes a per-bin scale.
        scale_blocks.append(jnp.full((L,), params["w_interp"][k], jnp.float32))
        # F.interpolate 'nearest' back to D, folded with this channel of the feature-conv
        # weight: wfold_k[b, f] = sum_{j: src(j)==b} wf1[f, 1+idx, j].
        src = np.minimum((np.arange(D) * L) // D, L - 1)
        onehot = jnp.asarray(src[:, None] == b, jnp.float32)             # (D, L)
        wfold_blocks.append(onehot.T @ wf1[:, 1 + idx, :].T)             # (L, F1)

    p_mat = jnp.concatenate(p_blocks, axis=1)                            # (D, Ltot)
    wscale = jnp.concatenate(scale_blocks).reshape(1, -1)                # (1, Ltot)
    wfold = jnp.concatenate(wfold_blocks, axis=0)                        # (Ltot, F1)

    wx = wf1[:, 0, :].T                                                  # passthrough channel (D, F1)
    bf1 = params["bf1"].reshape(1, f1)

    wmu = params["wf2"][:se, :].T                                        # (F1, SE)
    bmu = params["bf2"][:se].reshape(1, se)
    wsig = params["wf2"][se:, :].T                                       # (F1, SE)
    bsig = params["bf2"][se:].reshape(1, se)

    wc = params["wc"].T                                                  # (SE, SE)
    bc = params["bc"].reshape(1, se)

    whl = jnp.concatenate([params["wh"].T, params["wl"].T], axis=1)      # (SE, bit+numClass)
    bhl = jnp.concatenate([params["bh"], params["bl"]]).reshape(1, -1)

    return (p_mat, wscale, wx, wfold, bf1, wmu, bmu, wsig, bsig, wc, bc, whl, bhl)


def textnet_forward(x, eps, kparams, *, bit, tb=None):
    """x: (B, dimTxt) f32, eps: (B, SE) f32 standard-normal noise.
    Returns (fea_T, hsh_T, lab_T, fea_I_pred, mu_T, log_sigma_T), each (B, .)."""
    (p_mat, wscale, wx, wfold, bf1, wmu, bmu, wsig, bsig, wc, bc, whl, bhl) = kparams
    B, D = x.shape
    se = wmu.shape[1]
    hlw = whl.shape[1]
    if tb is None:
        tb = min(B, 128)
    assert B % tb == 0, "batch must be divisible by the batch tile"

    # Grid-invariant weight operands: single-buffered (no pointless double-buffering).
    def const(arr):
        return pl.BlockSpec(arr.shape, lambda b: (0, 0),
                            pipeline_mode=pl.Buffered(buffer_count=1))

    def batch2d(width):
        return pl.BlockSpec((tb, width), lambda b: (b, 0))

    outs = pl.pallas_call(
        functools.partial(textnet_kernel, bit),
        grid=(B // tb,),
        in_specs=[
            batch2d(D),                 # x (per-batch tile)
            batch2d(se),                # eps (per-batch tile)
            const(p_mat), const(wscale), const(wx), const(wfold), const(bf1),
            const(wmu), const(bmu), const(wsig), const(bsig),
            const(wc), const(bc), const(whl), const(bhl),
        ],
        out_specs=[batch2d(se), batch2d(hlw), batch2d(se), batch2d(se), batch2d(se)],
        out_shape=[
            jax.ShapeDtypeStruct((B, se), jnp.float32),    # fea_T
            jax.ShapeDtypeStruct((B, hlw), jnp.float32),   # fused [hash | label]
            jax.ShapeDtypeStruct((B, se), jnp.float32),    # fea_I_pred
            jax.ShapeDtypeStruct((B, se), jnp.float32),    # mu_T
            jax.ShapeDtypeStruct((B, se), jnp.float32),    # log_sigma_T
        ],
        compiler_params=pltpu.CompilerParams(
            dimension_semantics=("parallel",)),
    )(x, eps, p_mat, wscale, wx, wfold, bf1, wmu, bmu, wsig, bsig, wc, bc, whl, bhl)

    fea, hl, pred, mu, logsig = outs
    hsh, lab = hl[:, :bit], hl[:, bit:]
    # Note: torch.squeeze would also drop the batch dim when B == 1; we keep (B, C) outputs.
    return fea, hsh, lab, pred, mu, logsig


# --------------------------- pure-JAX reference (op-by-op) ---------------------------

def _lrn_reference(a):
    """nn.LocalResponseNorm(size=4, alpha=1e-4, beta=0.75, k=2.0) on (B, C) channels."""
    _, c = a.shape
    sq = a * a
    pad = jnp.pad(sq, ((0, 0), (LRN_SIZE // 2, (LRN_SIZE - 1) // 2)))
    div = sum(pad[:, s:s + c] for s in range(LRN_SIZE)) / LRN_SIZE
    return a / (LRN_K + LRN_ALPHA * div) ** LRN_BETA


def reference_forward(x, eps, params, *, se, bit):
    B, D = x.shape
    chans = [x]
    for k in POOL_FACTORS:
        kw = 5 * k
        L = D // kw
        pooled = x[:, :L * kw].reshape(B, L, kw).mean(axis=2)            # AvgPool2d([1, 5k])
        conv = jnp.maximum(params["w_interp"][k] * pooled, 0.0)          # 1x1 conv (no bias) + ReLU
        src = np.minimum((np.arange(D) * L) // D, L - 1)                 # F.interpolate 'nearest'
        chans.append(conv[:, src])
    ms = jnp.stack(chans, axis=1)                                        # MultiScal (B, 6, D)
    h1 = jnp.einsum("bcd,fcd->bf", ms, params["wf1"]) + params["bf1"]    # Conv2d(6->F1,(1,D))
    h1 = jnp.maximum(h1, 0.0)
    n1 = _lrn_reference(h1)
    musig = jnp.maximum(n1 @ params["wf2"].T + params["bf2"], 0.0)       # Conv2d(F1->2SE,1x1)+ReLU
    mu, logsig = musig[:, :se], musig[:, se:]
    fea = jnp.maximum(eps * jnp.exp(0.5 * logsig) + mu, 0.0)
    pred = fea @ params["wc"].T + params["bc"]
    norm = _lrn_reference(fea)
    hsh = jnp.tanh(norm @ params["wh"].T + params["bh"])
    lab = jax.nn.sigmoid(norm @ params["wl"].T + params["bl"])
    return fea, hsh, lab, pred, mu, logsig


def init_params(key, *, dim_txt, f1, se, bit, num_class):
    """normal(std=0.01) for every conv weight/bias, matching init_parameters_recursively."""
    ks = jax.random.split(key, 15)
    n = lambda k, shape: 0.01 * jax.random.normal(k, shape, jnp.float32)
    return dict(
        w_interp={kf: n(ks[i], ()) for i, kf in enumerate(POOL_FACTORS)},
        wf1=n(ks[5], (f1, 6, dim_txt)), bf1=n(ks[6], (f1,)),
        wf2=n(ks[7], (2 * se, f1)),     bf2=n(ks[8], (2 * se,)),
        wc=n(ks[9], (se, se)),          bc=n(ks[10], (se,)),
        wh=n(ks[11], (bit, se)),        bh=n(ks[12], (bit,)),
        wl=n(ks[13], (num_class, se)),  bl=n(ks[14], (num_class,)),
    )


if __name__ == "__main__":
    # Small shapes consistent with the module: dimTxt must be >= 50 so the k=10 pooling
    # branch produces at least one bin (150 is divisible by every pooling stride).
    # F1 / SE are kept multiples of 128 (lane-aligned, like the real 4096 / SEMANTIC_EMBED)
    # so the LRN lane rolls stay vreg-aligned.
    B, D = 16, 150
    F1, SE, BIT, NC = 256, 128, 16, 8   # toy stand-ins for 4096 / SEMANTIC_EMBED / bit / numClass
    TB = 8                              # batch rows per grid step -> grid of 2 parallel steps

    key = jax.random.PRNGKey(0)
    kx, ke, kp = jax.random.split(key, 3)
    x = jax.random.normal(kx, (B, D), jnp.float32)
    eps = jax.random.normal(ke, (B, SE), jnp.float32)      # reparameterisation noise
    params = init_params(kp, dim_txt=D, f1=F1, se=SE, bit=BIT, num_class=NC)
    kparams = prepare_kernel_params(params, D, SE)

    outs = textnet_forward(x, eps, kparams, bit=BIT, tb=TB)
    jax.block_until_ready(outs)

    refs = reference_forward(x, eps, params, se=SE, bit=BIT)
    names = ("fea_T", "hsh_T", "lab_T", "fea_I_pred", "mu_T", "log_sigma_T")
    for name, got, want in zip(names, outs, refs):
        assert got.shape == want.shape, (name, got.shape, want.shape)
        # Tolerance accounts for default-precision f32 MXU matmuls.
        assert jnp.allclose(got, want, atol=2e-3, rtol=2e-2), name

    print("KERNEL_OK")
</pallas_src>

<mosaic_0001>
module attributes {stable_mosaic.version = 11 : i64} {
  func.func @textnet_kernel(%arg0: i32, %arg1: memref<8x150xf32, #tpu.memory_space<vmem>>, %arg2: memref<8x128xf32, #tpu.memory_space<vmem>>, %arg3: memref<150x63xf32, #tpu.memory_space<vmem>>, %arg4: memref<1x63xf32, #tpu.memory_space<vmem>>, %arg5: memref<150x256xf32, #tpu.memory_space<vmem>>, %arg6: memref<63x256xf32, #tpu.memory_space<vmem>>, %arg7: memref<1x256xf32, #tpu.memory_space<vmem>>, %arg8: memref<256x128xf32, #tpu.memory_space<vmem>>, %arg9: memref<1x128xf32, #tpu.memory_space<vmem>>, %arg10: memref<256x128xf32, #tpu.memory_space<vmem>>, %arg11: memref<1x128xf32, #tpu.memory_space<vmem>>, %arg12: memref<128x128xf32, #tpu.memory_space<vmem>>, %arg13: memref<1x128xf32, #tpu.memory_space<vmem>>, %arg14: memref<128x24xf32, #tpu.memory_space<vmem>>, %arg15: memref<1x24xf32, #tpu.memory_space<vmem>>, %arg16: memref<8x128xf32, #tpu.memory_space<vmem>>, %arg17: memref<8x24xf32, #tpu.memory_space<vmem>>, %arg18: memref<8x128xf32, #tpu.memory_space<vmem>>, %arg19: memref<8x128xf32, #tpu.memory_space<vmem>>, %arg20: memref<8x128xf32, #tpu.memory_space<vmem>>) attributes {dimension_semantics = [#tpu.dimension_semantics<parallel>], iteration_bounds = array<i64: 2>, scalar_prefetch = 0 : i64, scratch_operands = 0 : i64, tpu.core_type = #tpu.core_type<tc>, window_params = [{transform_indices = @transform_0, window_bounds = array<i64: 8, 150>}, {transform_indices = @transform_1, window_bounds = array<i64: 8, 128>}, {pipeline_mode = #tpu.pipeline_mode<synchronous>, transform_indices = @transform_2, window_bounds = array<i64: 150, 63>}, {pipeline_mode = #tpu.pipeline_mode<synchronous>, transform_indices = @transform_3, window_bounds = array<i64: 1, 63>}, {pipeline_mode = #tpu.pipeline_mode<synchronous>, transform_indices = @transform_4, window_bounds = array<i64: 150, 256>}, {pipeline_mode = #tpu.pipeline_mode<synchronous>, transform_indices = @transform_5, window_bounds = array<i64: 63, 256>}, {pipeline_mode = #tpu.pipeline_mode<synchronous>, transform_indices = @transform_6, window_bounds = array<i64: 1, 256>}, {pipeline_mode = #tpu.pipeline_mode<synchronous>, transform_indices = @transform_7, window_bounds = array<i64: 256, 128>}, {pipeline_mode = #tpu.pipeline_mode<synchronous>, transform_indices = @transform_8, window_bounds = array<i64: 1, 128>}, {pipeline_mode = #tpu.pipeline_mode<synchronous>, transform_indices = @transform_9, window_bounds = array<i64: 256, 128>}, {pipeline_mode = #tpu.pipeline_mode<synchronous>, transform_indices = @transform_10, window_bounds = array<i64: 1, 128>}, {pipeline_mode = #tpu.pipeline_mode<synchronous>, transform_indices = @transform_11, window_bounds = array<i64: 128, 128>}, {pipeline_mode = #tpu.pipeline_mode<synchronous>, transform_indices = @transform_12, window_bounds = array<i64: 1, 128>}, {pipeline_mode = #tpu.pipeline_mode<synchronous>, transform_indices = @transform_13, window_bounds = array<i64: 128, 24>}, {pipeline_mode = #tpu.pipeline_mode<synchronous>, transform_indices = @transform_14, window_bounds = array<i64: 1, 24>}, {transform_indices = @transform_15, window_bounds = array<i64: 8, 128>}, {transform_indices = @transform_16, window_bounds = array<i64: 8, 24>}, {transform_indices = @transform_17, window_bounds = array<i64: 8, 128>}, {transform_indices = @transform_18, window_bounds = array<i64: 8, 128>}, {transform_indices = @transform_19, window_bounds = array<i64: 8, 128>}]} {
    %c0 = arith.constant 0 : index
    %c0_0 = arith.constant 0 : index
    %0 = vector.load %arg1[%c0, %c0_0] : memref<8x150xf32, #tpu.memory_space<vmem>>, vector<8x150xf32>
    %c0_1 = arith.constant 0 : index
    %c0_2 = arith.constant 0 : index
    %1 = vector.load %arg3[%c0_1, %c0_2] : memref<150x63xf32, #tpu.memory_space<vmem>>, vector<150x63xf32>
    %cst = arith.constant dense<0.000000e+00> : vector<8x63xf32>
    %2 = tpu.matmul %0, %1, %cst {dimension_numbers = #tpu.dot_dimension_numbers<[1], [0], [0], [1], [0, 0, 1, 1], [], []>} : vector<8x150xf32>, vector<150x63xf32>, vector<8x63xf32> -> vector<8x63xf32>
    %c0_3 = arith.constant 0 : index
    %c0_4 = arith.constant 0 : index
    %3 = vector.load %arg4[%c0_3, %c0_4] : memref<1x63xf32, #tpu.memory_space<vmem>>, vector<1x63xf32>
    %4 = vector.broadcast %3 : vector<1x63xf32> to vector<8x63xf32>
    %5 = arith.mulf %2, %4 : vector<8x63xf32>
    %cst_5 = arith.constant 0.000000e+00 : f32
    %6 = vector.broadcast %cst_5 : f32 to vector<8x63xf32>
    %7 = arith.maximumf %5, %6 : vector<8x63xf32>
    %c0_6 = arith.constant 0 : index
    %c0_7 = arith.constant 0 : index
    %8 = vector.load %arg5[%c0_6, %c0_7] : memref<150x256xf32, #tpu.memory_space<vmem>>, vector<150x256xf32>
    %cst_8 = arith.constant dense<0.000000e+00> : vector<8x256xf32>
    %9 = tpu.matmul %0, %8, %cst_8 {dimension_numbers = #tpu.dot_dimension_numbers<[1], [0], [0], [1], [0, 0, 1, 1], [], []>} : vector<8x150xf32>, vector<150x256xf32>, vector<8x256xf32> -> vector<8x256xf32>
    %c0_9 = arith.constant 0 : index
    %c0_10 = arith.constant 0 : index
    %10 = vector.load %arg6[%c0_9, %c0_10] : memref<63x256xf32, #tpu.memory_space<vmem>>, vector<63x256xf32>
    %cst_11 = arith.constant dense<0.000000e+00> : vector<8x256xf32>
    %11 = tpu.matmul %7, %10, %cst_11 {dimension_numbers = #tpu.dot_dimension_numbers<[1], [0], [0], [1], [0, 0, 1, 1], [], []>} : vector<8x63xf32>, vector<63x256xf32>, vector<8x256xf32> -> vector<8x256xf32>
    %12 = arith.addf %9, %11 : vector<8x256xf32>
    %c0_12 = arith.constant 0 : index
    %c0_13 = arith.constant 0 : index
    %13 = vector.load %arg7[%c0_12, %c0_13] : memref<1x256xf32, #tpu.memory_space<vmem>>, vector<1x256xf32>
    %14 = vector.broadcast %13 : vector<1x256xf32> to vector<8x256xf32>
    %15 = arith.addf %12, %14 : vector<8x256xf32>
    %cst_14 = arith.constant 0.000000e+00 : f32
    %16 = vector.broadcast %cst_14 : f32 to vector<8x256xf32>
    %17 = arith.maximumf %15, %16 : vector<8x256xf32>
    %18 = arith.mulf %17, %17 : vector<8x256xf32>
    %19 = tpu.iota {dimensions = array<i32: 1>} : vector<8x256xi32>
    %cst_15 = arith.constant 0.000000e+00 : f32
    %20 = vector.broadcast %cst_15 : f32 to vector<8x256xf32>
    %c1_i32 = arith.constant 1 : i32
    %21 = vector.broadcast %c1_i32 : i32 to vector<8x256xi32>
    %22 = arith.cmpi sge, %19, %21 : vector<8x256xi32>
    %c1_i32_16 = arith.constant 1 : i32
    %23 = tpu.dynamic_rotate %18 by %c1_i32_16 dim 1 : vector<8x256xf32>, i32 -> vector<8x256xf32>
    %24 = arith.select %22, %23, %20 : vector<8x256xi1>, vector<8x256xf32>
    %25 = arith.addf %18, %24 : vector<8x256xf32>
    %c2_i32 = arith.constant 2 : i32
    %26 = vector.broadcast %c2_i32 : i32 to vector<8x256xi32>
    %27 = arith.cmpi sge, %19, %26 : vector<8x256xi32>
    %c2_i32_17 = arith.constant 2 : i32
    %28 = tpu.dynamic_rotate %18 by %c2_i32_17 dim 1 : vector<8x256xf32>, i32 -> vector<8x256xf32>
    %29 = arith.select %27, %28, %20 : vector<8x256xi1>, vector<8x256xf32>
    %30 = arith.addf %25, %29 : vector<8x256xf32>
    %c255_i32 = arith.constant 255 : i32
    %31 = vector.broadcast %c255_i32 : i32 to vector<8x256xi32>
    %32 = arith.cmpi slt, %19, %31 : vector<8x256xi32>
    %c255_i32_18 = arith.constant 255 : i32
    %33 = tpu.dynamic_rotate %18 by %c255_i32_18 dim 1 : vector<8x256xf32>, i32 -> vector<8x256xf32>
    %34 = arith.select %32, %33, %20 : vector<8x256xi1>, vector<8x256xf32>
    %35 = arith.addf %30, %34 : vector<8x256xf32>
    %cst_19 = arith.constant 2.500000e-01 : f32
    %36 = vector.broadcast %cst_19 : f32 to vector<8x256xf32>
    %37 = arith.mulf %35, %36 : vector<8x256xf32>
    %cst_20 = arith.constant 9.99999974E-5 : f32
    %38 = vector.broadcast %cst_20 : f32 to vector<8x256xf32>
    %39 = arith.mulf %38, %37 : vector<8x256xf32>
    %cst_21 = arith.constant 2.000000e+00 : f32
    %40 = vector.broadcast %cst_21 : f32 to vector<8x256xf32>
    %41 = arith.addf %40, %39 : vector<8x256xf32>
    %42 = math.log %41 : vector<8x256xf32>
    %cst_22 = arith.constant -7.500000e-01 : f32
    %43 = vector.broadcast %cst_22 : f32 to vector<8x256xf32>
    %44 = arith.mulf %43, %42 : vector<8x256xf32>
    %45 = math.exp %44 : vector<8x256xf32>
    %46 = arith.mulf %17, %45 : vector<8x256xf32>
    %c0_23 = arith.constant 0 : index
    %c0_24 = arith.constant 0 : index
    %47 = vector.load %arg8[%c0_23, %c0_24] : memref<256x128xf32, #tpu.memory_space<vmem>>, vector<256x128xf32>
    %cst_25 = arith.constant dense<0.000000e+00> : vector<8x128xf32>
    %48 = tpu.matmul %46, %47, %cst_25 {dimension_numbers = #tpu.dot_dimension_numbers<[1], [0], [0], [1], [0, 0, 1, 1], [], []>} : vector<8x256xf32>, vector<256x128xf32>, vector<8x128xf32> -> vector<8x128xf32>
    %c0_26 = arith.constant 0 : index
    %c0_27 = arith.constant 0 : index
    %49 = vector.load %arg9[%c0_26, %c0_27] : memref<1x128xf32, #tpu.memory_space<vmem>>, vector<1x128xf32>
    %50 = vector.broadcast %49 : vector<1x128xf32> to vector<8x128xf32>
    %51 = arith.addf %48, %50 : vector<8x128xf32>
    %cst_28 = arith.constant 0.000000e+00 : f32
    %52 = vector.broadcast %cst_28 : f32 to vector<8x128xf32>
    %53 = arith.maximumf %51, %52 : vector<8x128xf32>
    %c0_29 = arith.constant 0 : index
    %c0_30 = arith.constant 0 : index
    %54 = vector.load %arg10[%c0_29, %c0_30] : memref<256x128xf32, #tpu.memory_space<vmem>>, vector<256x128xf32>
    %cst_31 = arith.constant dense<0.000000e+00> : vector<8x128xf32>
    %55 = tpu.matmul %46, %54, %cst_31 {dimension_numbers = #tpu.dot_dimension_numbers<[1], [0], [0], [1], [0, 0, 1, 1], [], []>} : vector<8x256xf32>, vector<256x128xf32>, vector<8x128xf32> -> vector<8x128xf32>
    %c0_32 = arith.constant 0 : index
    %c0_33 = arith.constant 0 : index
    %56 = vector.load %arg11[%c0_32, %c0_33] : memref<1x128xf32, #tpu.memory_space<vmem>>, vector<1x128xf32>
    %57 = vector.broadcast %56 : vector<1x128xf32> to vector<8x128xf32>
    %58 = arith.addf %55, %57 : vector<8x128xf32>
    %cst_34 = arith.constant 0.000000e+00 : f32
    %59 = vector.broadcast %cst_34 : f32 to vector<8x128xf32>
    %60 = arith.maximumf %58, %59 : vector<8x128xf32>
    %c0_35 = arith.constant 0 : index
    %c0_36 = arith.constant 0 : index
    %61 = vector.load %arg2[%c0_35, %c0_36] : memref<8x128xf32, #tpu.memory_space<vmem>>, vector<8x128xf32>
    %cst_37 = arith.constant 5.000000e-01 : f32
    %62 = vector.broadcast %cst_37 : f32 to vector<8x128xf32>
    %63 = arith.mulf %62, %60 : vector<8x128xf32>
    %64 = math.exp %63 : vector<8x128xf32>
    %65 = arith.mulf %61, %64 : vector<8x128xf32>
    %66 = arith.addf %65, %53 : vector<8x128xf32>
    %cst_38 = arith.constant 0.000000e+00 : f32
    %67 = vector.broadcast %cst_38 : f32 to vector<8x128xf32>
    %68 = arith.maximumf %66, %67 : vector<8x128xf32>
    %c0_39 = arith.constant 0 : index
    %c0_40 = arith.constant 0 : index
    %69 = vector.load %arg12[%c0_39, %c0_40] : memref<128x128xf32, #tpu.memory_space<vmem>>, vector<128x128xf32>
    %cst_41 = arith.constant dense<0.000000e+00> : vector<8x128xf32>
    %70 = tpu.matmul %68, %69, %cst_41 {dimension_numbers = #tpu.dot_dimension_numbers<[1], [0], [0], [1], [0, 0, 1, 1], [], []>} : vector<8x128xf32>, vector<128x128xf32>, vector<8x128xf32> -> vector<8x128xf32>
    %c0_42 = arith.constant 0 : index
    %c0_43 = arith.constant 0 : index
    %71 = vector.load %arg13[%c0_42, %c0_43] : memref<1x128xf32, #tpu.memory_space<vmem>>, vector<1x128xf32>
    %72 = vector.broadcast %71 : vector<1x128xf32> to vector<8x128xf32>
    %73 = arith.addf %70, %72 : vector<8x128xf32>
    %74 = arith.mulf %68, %68 : vector<8x128xf32>
    %75 = tpu.iota {dimensions = array<i32: 1>} : vector<8x128xi32>
    %cst_44 = arith.constant 0.000000e+00 : f32
    %76 = vector.broadcast %cst_44 : f32 to vector<8x128xf32>
    %c1_i32_45 = arith.constant 1 : i32
    %77 = vector.broadcast %c1_i32_45 : i32 to vector<8x128xi32>
    %78 = arith.cmpi sge, %75, %77 : vector<8x128xi32>
    %c1_i32_46 = arith.constant 1 : i32
    %79 = tpu.dynamic_rotate %74 by %c1_i32_46 dim 1 : vector<8x128xf32>, i32 -> vector<8x128xf32>
    %80 = arith.select %78, %79, %76 : vector<8x128xi1>, vector<8x128xf32>
    %81 = arith.addf %74, %80 : vector<8x128xf32>
    %c2_i32_47 = arith.constant 2 : i32
    %82 = vector.broadcast %c2_i32_47 : i32 to vector<8x128xi32>
    %83 = arith.cmpi sge, %75, %82 : vector<8x128xi32>
    %c2_i32_48 = arith.constant 2 : i32
    %84 = tpu.dynamic_rotate %74 by %c2_i32_48 dim 1 : vector<8x128xf32>, i32 -> vector<8x128xf32>
    %85 = arith.select %83, %84, %76 : vector<8x128xi1>, vector<8x128xf32>
    %86 = arith.addf %81, %85 : vector<8x128xf32>
    %c127_i32 = arith.constant 127 : i32
    %87 = vector.broadcast %c127_i32 : i32 to vector<8x128xi32>
    %88 = arith.cmpi slt, %75, %87 : vector<8x128xi32>
    %c127_i32_49 = arith.constant 127 : i32
    %89 = tpu.dynamic_rotate %74 by %c127_i32_49 dim 1 : vector<8x128xf32>, i32 -> vector<8x128xf32>
    %90 = arith.select %88, %89, %76 : vector<8x128xi1>, vector<8x128xf32>
    %91 = arith.addf %86, %90 : vector<8x128xf32>
    %cst_50 = arith.constant 2.500000e-01 : f32
    %92 = vector.broadcast %cst_50 : f32 to vector<8x128xf32>
    %93 = arith.mulf %91, %92 : vector<8x128xf32>
    %cst_51 = arith.constant 9.99999974E-5 : f32
    %94 = vector.broadcast %cst_51 : f32 to vector<8x128xf32>
    %95 = arith.mulf %94, %93 : vector<8x128xf32>
    %cst_52 = arith.constant 2.000000e+00 : f32
    %96 = vector.broadcast %cst_52 : f32 to vector<8x128xf32>
    %97 = arith.addf %96, %95 : vector<8x128xf32>
    %98 = math.log %97 : vector<8x128xf32>
    %cst_53 = arith.constant -7.500000e-01 : f32
    %99 = vector.broadcast %cst_53 : f32 to vector<8x128xf32>
    %100 = arith.mulf %99, %98 : vector<8x128xf32>
    %101 = math.exp %100 : vector<8x128xf32>
    %102 = arith.mulf %68, %101 : vector<8x128xf32>
    %c0_54 = arith.constant 0 : index
    %c0_55 = arith.constant 0 : index
    %103 = vector.load %arg14[%c0_54, %c0_55] : memref<128x24xf32, #tpu.memory_space<vmem>>, vector<128x24xf32>
    %cst_56 = arith.constant dense<0.000000e+00> : vector<8x24xf32>
    %104 = tpu.matmul %102, %103, %cst_56 {dimension_numbers = #tpu.dot_dimension_numbers<[1], [0], [0], [1], [0, 0, 1, 1], [], []>} : vector<8x128xf32>, vector<128x24xf32>, vector<8x24xf32> -> vector<8x24xf32>
    %c0_57 = arith.constant 0 : index
    %c0_58 = arith.constant 0 : index
    %105 = vector.load %arg15[%c0_57, %c0_58] : memref<1x24xf32, #tpu.memory_space<vmem>>, vector<1x24xf32>
    %106 = vector.broadcast %105 : vector<1x24xf32> to vector<8x24xf32>
    %107 = arith.addf %104, %106 : vector<8x24xf32>
    %108 = tpu.iota {dimensions = array<i32: 1>} : vector<8x24xi32>
    %c16_i32 = arith.constant 16 : i32
    %109 = vector.broadcast %c16_i32 : i32 to vector<8x24xi32>
    %110 = arith.cmpi slt, %108, %109 : vector<8x24xi32>
    %111 = math.tanh %107 : vector<8x24xf32>
    %cst_59 = arith.constant 0.000000e+00 : f32
    %112 = vector.broadcast %cst_59 : f32 to vector<8x24xf32>
    %113 = arith.subf %112, %107 : vector<8x24xf32>
    %114 = math.exp %113 : vector<8x24xf32>
    %cst_60 = arith.constant 1.000000e+00 : f32
    %115 = vector.broadcast %cst_60 : f32 to vector<8x24xf32>
    %116 = arith.addf %115, %114 : vector<8x24xf32>
    %cst_61 = arith.constant 1.000000e+00 : f32
    %117 = vector.broadcast %cst_61 : f32 to vector<8x24xf32>
    %118 = arith.divf %117, %116 : vector<8x24xf32>
    %119 = arith.select %110, %111, %118 : vector<8x24xi1>, vector<8x24xf32>
    %c0_62 = arith.constant 0 : index
    %c0_63 = arith.constant 0 : index
    %120 = vector.load %arg17[%c0_62, %c0_63] : memref<8x24xf32, #tpu.memory_space<vmem>>, vector<8x24xf32>
    tpu.vector_store %arg17[%c0_62, %c0_63], %119 {strides = array<i32>} : memref<8x24xf32, #tpu.memory_space<vmem>>, vector<8x24xf32>,
    %c0_64 = arith.constant 0 : index
    %c0_65 = arith.constant 0 : index
    %121 = vector.load %arg16[%c0_64, %c0_65] : memref<8x128xf32, #tpu.memory_space<vmem>>, vector<8x128xf32>
    tpu.vector_store %arg16[%c0_64, %c0_65], %68 {strides = array<i32>} : memref<8x128xf32, #tpu.memory_space<vmem>>, vector<8x128xf32>,
    %c0_66 = arith.constant 0 : index
    %c0_67 = arith.constant 0 : index
    %122 = vector.load %arg18[%c0_66, %c0_67] : memref<8x128xf32, #tpu.memory_space<vmem>>, vector<8x128xf32>
    tpu.vector_store %arg18[%c0_66, %c0_67], %73 {strides = array<i32>} : memref<8x128xf32, #tpu.memory_space<vmem>>, vector<8x128xf32>,
    %c0_68 = arith.constant 0 : index
    %c0_69 = arith.constant 0 : index
    %123 = vector.load %arg19[%c0_68, %c0_69] : memref<8x128xf32, #tpu.memory_space<vmem>>, vector<8x128xf32>
    tpu.vector_store %arg19[%c0_68, %c0_69], %53 {strides = array<i32>} : memref<8x128xf32, #tpu.memory_space<vmem>>, vector<8x128xf32>,
    %c0_70 = arith.constant 0 : index
    %c0_71 = arith.constant 0 : index
    %124 = vector.load %arg20[%c0_70, %c0_71] : memref<8x128xf32, #tpu.memory_space<vmem>>, vector<8x128xf32>
    tpu.vector_store %arg20[%c0_70, %c0_71], %60 {strides = array<i32>} : memref<8x128xf32, #tpu.memory_space<vmem>>, vector<8x128xf32>,
    return
  }
  func.func @transform_0(%arg0: i32) -> (i32, i32) {
    %c0_i32 = arith.constant 0 : i32
    %c0_i32_0 = arith.constant 0 : i32
    return %arg0, %c0_i32 : i32, i32
  }
  func.func @transform_1(%arg0: i32) -> (i32, i32) {
    %c0_i32 = arith.constant 0 : i32
    %c0_i32_0 = arith.constant 0 : i32
    return %arg0, %c0_i32 : i32, i32
  }
  func.func @transform_2(%arg0: i32) -> (i32, i32) {
    %c0_i32 = arith.constant 0 : i32
    %c0_i32_0 = arith.constant 0 : i32
    %c0_i32_1 = arith.constant 0 : i32
    return %c0_i32, %c0_i32_0 : i32, i32
  }
  func.func @transform_3(%arg0: i32) -> (i32, i32) {
    %c0_i32 = arith.constant 0 : i32
    %c0_i32_0 = arith.constant 0 : i32
    %c0_i32_1 = arith.constant 0 : i32
    return %c0_i32, %c0_i32_0 : i32, i32
  }
  func.func @transform_4(%arg0: i32) -> (i32, i32) {
    %c0_i32 = arith.constant 0 : i32
    %c0_i32_0 = arith.constant 0 : i32
    %c0_i32_1 = arith.constant 0 : i32
    return %c0_i32, %c0_i32_0 : i32, i32
  }
  func.func @transform_5(%arg0: i32) -> (i32, i32) {
    %c0_i32 = arith.constant 0 : i32
    %c0_i32_0 = arith.constant 0 : i32
    %c0_i32_1 = arith.constant 0 : i32
    return %c0_i32, %c0_i32_0 : i32, i32
  }
  func.func @transform_6(%arg0: i32) -> (i32, i32) {
    %c0_i32 = arith.constant 0 : i32
    %c0_i32_0 = arith.constant 0 : i32
    %c0_i32_1 = arith.constant 0 : i32
    return %c0_i32, %c0_i32_0 : i32, i32
  }
  func.func @transform_7(%arg0: i32) -> (i32, i32) {
    %c0_i32 = arith.constant 0 : i32
    %c0_i32_0 = arith.constant 0 : i32
    %c0_i32_1 = arith.constant 0 : i32
    return %c0_i32, %c0_i32_0 : i32, i32
  }
  func.func @transform_8(%arg0: i32) -> (i32, i32) {
    %c0_i32 = arith.constant 0 : i32
    %c0_i32_0 = arith.constant 0 : i32
    %c0_i32_1 = arith.constant 0 : i32
    return %c0_i32, %c0_i32_0 : i32, i32
  }
  func.func @transform_9(%arg0: i32) -> (i32, i32) {
    %c0_i32 = arith.constant 0 : i32
    %c0_i32_0 = arith.constant 0 : i32
    %c0_i32_1 = arith.constant 0 : i32
    return %c0_i32, %c0_i32_0 : i32, i32
  }
  func.func @transform_10(%arg0: i32) -> (i32, i32) {
    %c0_i32 = arith.constant 0 : i32
    %c0_i32_0 = arith.constant 0 : i32
    %c0_i32_1 = arith.constant 0 : i32
    return %c0_i32, %c0_i32_0 : i32, i32
  }
  func.func @transform_11(%arg0: i32) -> (i32, i32) {
    %c0_i32 = arith.constant 0 : i32
    %c0_i32_0 = arith.constant 0 : i32
    %c0_i32_1 = arith.constant 0 : i32
    return %c0_i32, %c0_i32_0 : i32, i32
  }
  func.func @transform_12(%arg0: i32) -> (i32, i32) {
    %c0_i32 = arith.constant 0 : i32
    %c0_i32_0 = arith.constant 0 : i32
    %c0_i32_1 = arith.constant 0 : i32
    return %c0_i32, %c0_i32_0 : i32, i32
  }
  func.func @transform_13(%arg0: i32) -> (i32, i32) {
    %c0_i32 = arith.constant 0 : i32
    %c0_i32_0 = arith.constant 0 : i32
    %c0_i32_1 = arith.constant 0 : i32
    return %c0_i32, %c0_i32_0 : i32, i32
  }
  func.func @transform_14(%arg0: i32) -> (i32, i32) {
    %c0_i32 = arith.constant 0 : i32
    %c0_i32_0 = arith.constant 0 : i32
    %c0_i32_1 = arith.constant 0 : i32
    return %c0_i32, %c0_i32_0 : i32, i32
  }
  func.func @transform_15(%arg0: i32) -> (i32, i32) {
    %c0_i32 = arith.constant 0 : i32
    %c0_i32_0 = arith.constant 0 : i32
    return %arg0, %c0_i32 : i32, i32
  }
  func.func @transform_16(%arg0: i32) -> (i32, i32) {
    %c0_i32 = arith.constant 0 : i32
    %c0_i32_0 = arith.constant 0 : i32
    return %arg0, %c0_i32 : i32, i32
  }
  func.func @transform_17(%arg0: i32) -> (i32, i32) {
    %c0_i32 = arith.constant 0 : i32
    %c0_i32_0 = arith.constant 0 : i32
    return %arg0, %c0_i32 : i32, i32
  }
  func.func @transform_18(%arg0: i32) -> (i32, i32) {
    %c0_i32 = arith.constant 0 : i32
    %c0_i32_0 = arith.constant 0 : i32
    return %arg0, %c0_i32 : i32, i32
  }
  func.func @transform_19(%arg0: i32) -> (i32, i32) {
    %c0_i32 = arith.constant 0 : i32
    %c0_i32_0 = arith.constant 0 : i32
    return %arg0, %c0_i32 : i32, i32
  }
}

</mosaic_0001>

<llo_original>
// kernel: tpu_custom_call.1
$region0: #{tpu_custom_call.1}
  #allocation0 [shape = 'u32[]', space=smem, size = 0x4, offset = 0x4, fixed_abs, tag = 'smem constant byte address 0x4 - core index']
  #allocation1 [shape = 'u32[144,128]{1,0:T(1,128)}', space=vmem, size = 0x12000, scoped, tag = 'internal scratch']
  %s0 = inlined_call_operand.hbm [shape: f32[16,150], index: 0, kind: input, shape index: {}]
  %s1 = inlined_call_operand.hbm [shape: f32[16,128], index: 1, kind: input, shape index: {}]
  %s2 = inlined_call_operand.vmem [shape: f32[150,63], index: 2, kind: input, shape index: {}]
  %s3 = inlined_call_operand.vmem [shape: f32[1,63], index: 3, kind: input, shape index: {}]
  %s4 = inlined_call_operand.vmem [shape: f32[150,256], index: 4, kind: input, shape index: {}]
  %s5 = inlined_call_operand.vmem [shape: f32[63,256], index: 5, kind: input, shape index: {}]
  %s6 = inlined_call_operand.vmem [shape: f32[1,256], index: 6, kind: input, shape index: {}]
  %s7 = inlined_call_operand.hbm [shape: f32[256,128], index: 7, kind: input, shape index: {}]
  %s8 = inlined_call_operand.vmem [shape: f32[1,128], index: 8, kind: input, shape index: {}]
  %s9 = inlined_call_operand.hbm [shape: f32[256,128], index: 9, kind: input, shape index: {}]
  %s10 = inlined_call_operand.vmem [shape: f32[1,128], index: 10, kind: input, shape index: {}]
  %s11 = inlined_call_operand.hbm [shape: f32[128,128], index: 11, kind: input, shape index: {}]
  %s12 = inlined_call_operand.vmem [shape: f32[1,128], index: 12, kind: input, shape index: {}]
  %s13 = inlined_call_operand.vmem [shape: f32[128,24], index: 13, kind: input, shape index: {}]
  %s14 = inlined_call_operand.vmem [shape: f32[1,24], index: 14, kind: input, shape index: {}]
  %s15 = inlined_call_operand.hbm [shape: f32[16,128], index: 15, kind: output, shape index: {0}]
  %s16 = inlined_call_operand.hbm [shape: f32[16,24], index: 16, kind: output, shape index: {1}]
  %s17 = inlined_call_operand.hbm [shape: f32[16,128], index: 17, kind: output, shape index: {2}]
  %s18 = inlined_call_operand.hbm [shape: f32[16,128], index: 18, kind: output, shape index: {3}]
  %s19 = inlined_call_operand.hbm [shape: f32[16,128], index: 19, kind: output, shape index: {4}]
  %20 = xla_tuple %s15, %s16, %s17, %s18, %s19
  %s21 = sld [smem:[#allocation0]]
  $region145: #{tpu_custom_call.1} parent=0
    _
  %s23 = ssub.s32 1, %s21
  %s24 = scalar_select 0, %s23, %s21
  $region1: #{tpu_custom_call.1} parent=0
    #allocation2 [shape = 'u8[16384]{0}', space=vmem, size = 0x4000, scoped, tag = 'input window, operand 0']
    #allocation3 [shape = 's32[2]{0}', space=sflag, size = 0x8, scoped, tag = 'scoped memory for tpu_custom_call.1']
    #allocation4 [shape = 's32[2]{0}', space=sflag, size = 0x8, scoped, tag = 'scoped memory for tpu_custom_call.1']
    #allocation5 [shape = 'u8[8192]{0}', space=vmem, size = 0x2000, scoped, tag = 'input window, operand 1']
    #allocation6 [shape = 's32[2]{0}', space=sflag, size = 0x8, scoped, tag = 'scoped memory for tpu_custom_call.1']
    #allocation7 [shape = 'u8[131072]{0}', space=vmem, size = 0x20000, scoped, tag = 'input window, operand 7, single buffered']
    #allocation8 [shape = 'u8[131072]{0}', space=vmem, size = 0x20000, scoped, tag = 'input window, operand 9, single buffered']
    #allocation9 [shape = 's32[1]{0}', space=sflag, size = 0x4, scoped, tag = 'scoped memory for tpu_custom_call.1']
    #allocation10 [shape = 'u8[65536]{0}', space=vmem, size = 0x10000, scoped, tag = 'input window, operand 11, single buffered']
    #allocation11 [shape = 'u8[8192]{0}', space=vmem, size = 0x2000, scoped, tag = 'output window, operand 0']
    #allocation12 [shape = 'u8[8192]{0}', space=vmem, size = 0x2000, scoped, tag = 'output window, operand 1']
    #allocation13 [shape = 's32[2]{0}', space=sflag, size = 0x8, scoped, tag = 'scoped memory for tpu_custom_call.1']
    #allocation14 [shape = 'u8[8192]{0}', space=vmem, size = 0x2000, scoped, tag = 'output window, operand 2']
    #allocation15 [shape = 'u8[8192]{0}', space=vmem, size = 0x2000, scoped, tag = 'output window, operand 3']
    #allocation16 [shape = 's32[2]{0}', space=sflag, size = 0x8, scoped, tag = 'scoped memory for tpu_custom_call.1']
    #allocation17 [shape = 'u8[8192]{0}', space=vmem, size = 0x2000, scoped, tag = 'output window, operand 4']
    %25 = vsyncpa [#allocation3], 0
    %s26 = scalar_lea.sflag [#allocation3], 1
    %27 = vsyncpa %s26, 0
    %28 = vsyncpa [#allocation6], 0
    %s29 = scalar_lea.sflag [#allocation6], 1
    %30 = vsyncpa %s29, 0
    %31 = vsyncpa [#allocation9], 0
    %32 = vsyncpa [#allocation4], 0
    %s33 = scalar_lea.sflag [#allocation4], 1
    %34 = vsyncpa %s33, 0
    %35 = vsyncpa [#allocation13], 0
    %s36 = scalar_lea.sflag [#allocation13], 1
    %37 = vsyncpa %s36, 0
    %38 = vsyncpa [#allocation16], 0
    %s39 = scalar_lea.sflag [#allocation16], 1
    %40 = vsyncpa %s39, 0
    loop: start=0, step=1, limit=4
    $region2: #{tpu_custom_call.1} parent=1 // loop_pre_header
      _
    $region3: #{tpu_custom_call.1} parent=1 // loop_header
      %s42 = sphi 0, %s46
      %p43 = scmp.ge.s32.totalorder %s42, 4
      %s52 = sphi 0, %s54
      %s55 = sphi 0, %s52
      %s56 = sphi 0, %s55
      %s72 = sphi 0, %s56
      %s78 = sphi 0, %s80
      %s81 = sphi 0, %s78
      %s82 = sphi 0, %s81
      %s98 = sphi 0, %s82
      %s102 = sphi 0, %s102
      %s104 = sphi 0, %s102
      %s105 = sphi 0, %s104
      %s119 = sphi 0, %s105
      %s123 = sphi 0, %s123
      %s125 = sphi 0, %s123
      %s126 = sphi 0, %s125
      %s140 = sphi 0, %s126
      %s144 = sphi 0, %s144
      %s146 = sphi 0, %s144
      %s147 = sphi 0, %s146
      %s161 = sphi 0, %s147
      %s165 = sphi 0, %s165
      %s167 = sphi 0, %s165
      %s168 = sphi 0, %s167
      %s182 = sphi 0, %s168
      %s186 = sphi 0, %s186
      %s188 = sphi 0, %s186
      %s189 = sphi 0, %s188
      %s203 = sphi 0, %s189
      %s207 = sphi 0, %s207
      %s209 = sphi 0, %s207
      %s210 = sphi 0, %s209
      %s224 = sphi 0, %s210
      %s228 = sphi 0, %s228
      %s230 = sphi 0, %s228
      %s231 = sphi 0, %s230
      %s245 = sphi 0, %s231
      %s249 = sphi 0, %s249
      %s251 = sphi 0, %s249
      %s252 = sphi 0, %s251
      %s266 = sphi 0, %s252
      %s270 = sphi 0, %s270
      %s272 = sphi 0, %s270
      %s273 = sphi 0, %s272
      %s287 = sphi 0, %s273
      %s291 = sphi 0, %s291
      %s293 = sphi 0, %s291
      %s294 = sphi 0, %s293
      %s308 = sphi 0, %s294
      %s312 = sphi 0, %s312
      %s314 = sphi 0, %s312
      %s315 = sphi 0, %s314
      %s329 = sphi 0, %s315
      %s333 = sphi 0, %s333
      %s335 = sphi 0, %s333
      %s336 = sphi 0, %s335
      %s350 = sphi 0, %s336
      %s354 = sphi 0, %s354
      %s356 = sphi 0, %s354
      %s357 = sphi 0, %s356
      %s371 = sphi 0, %s357
      %s377 = sphi 0, %s379
      %s380 = sphi 0, %s377
      %s381 = sphi 0, %s380
      %s397 = sphi 0, %s381
      %s403 = sphi 0, %s405
      %s406 = sphi 0, %s403
      %s407 = sphi 0, %s406
      %s423 = sphi 0, %s407
      %s429 = sphi 0, %s431
      %s432 = sphi 0, %s429
      %s433 = sphi 0, %s432
      %s449 = sphi 0, %s433
      %s455 = sphi 0, %s457
      %s458 = sphi 0, %s455
      %s459 = sphi 0, %s458
      %s475 = sphi 0, %s459
      %s481 = sphi 0, %s483
      %s484 = sphi 0, %s481
      %s485 = sphi 0, %s484
      %s501 = sphi 0, %s485
    $region4: #{tpu_custom_call.1} parent=1 // loop_header_branch
      %45 = sbr.rel (%p43) target = $region8
    $region5: #{tpu_custom_call.1} parent=1 // loop_body
      %s47 = ssub.s32 %s42, 1
      %s48 = ssub.s32 %s42, 2
      %s49 = sadd.s32 %s42, 1
      %s50 = ssub.s32 %s42, %s49
      %p51 = scmp.eq.s32.totalorder %s50, 0
      %s53 = sadd.s32 %s52, 1
      %s54 = scalar_select %p51, %s52, %s53
      %p57 = pneg %p51
      %p58 = scmp.eq.s32.totalorder %s42, 1
      %p59 = por %p57, %p58
      %p60 = scmp.ne.s32.totalorder %s52, %s55
      %p61 = scmp.eq.s32.totalorder %s42, 0
      %p62 = por %p60, %p61
      %p63 = scmp.ne.s32.totalorder %s52, %s55
      %p64 = scmp.eq.s32.totalorder %s47, 1
      %p65 = por %p63, %p64
      %p66 = scmp.ne.s32.totalorder %s55, %s56
      %p67 = scmp.eq.s32.totalorder %s47, 0
      %p68 = por %p66, %p67
      %p69 = scmp.ne.s32.totalorder %s55, %s56
      %p70 = scmp.eq.s32.totalorder %s48, 1
      %p71 = por %p69, %p70
      %p73 = scmp.ne.s32.totalorder %s56, %s72
      %p74 = scmp.eq.s32.totalorder %s48, 0
      %p75 = por %p73, %p74
      %s76 = ssub.s32 %s42, %s49
      %p77 = scmp.eq.s32.totalorder %s76, 0
      %s79 = sadd.s32 %s78, 1
      %s80 = scalar_select %p77, %s78, %s79
      %p83 = pneg %p77
      %p84 = scmp.eq.s32.totalorder %s42, 1
      %p85 = por %p83, %p84
      %p86 = scmp.ne.s32.totalorder %s78, %s81
      %p87 = scmp.eq.s32.totalorder %s42, 0
      %p88 = por %p86, %p87
      %p89 = scmp.ne.s32.totalorder %s78, %s81
      %p90 = scmp.eq.s32.totalorder %s47, 1
      %p91 = por %p89, %p90
      %p92 = scmp.ne.s32.totalorder %s81, %s82
      %p93 = scmp.eq.s32.totalorder %s47, 0
      %p94 = por %p92, %p93
      %p95 = scmp.ne.s32.totalorder %s81, %s82
      %p96 = scmp.eq.s32.totalorder %s48, 1
      %p97 = por %p95, %p96
      %p99 = scmp.ne.s32.totalorder %s82, %s98
      %p100 = scmp.eq.s32.totalorder %s48, 0
      %p101 = por %p99, %p100
      %s103 = sadd.s32 %s102, 1
      %p106 = scmp.eq.s32.totalorder %s42, 1
      %p107 = scmp.ne.s32.totalorder %s102, %s104
      %p108 = scmp.eq.s32.totalorder %s42, 0
      %p109 = por %p107, %p108
      %p110 = scmp.ne.s32.totalorder %s102, %s104
      %p111 = scmp.eq.s32.totalorder %s47, 1
      %p112 = por %p110, %p111
      %p113 = scmp.ne.s32.totalorder %s104, %s105
      %p114 = scmp.eq.s32.totalorder %s47, 0
      %p115 = por %p113, %p114
      %p116 = scmp.ne.s32.totalorder %s104, %s105
      %p117 = scmp.eq.s32.totalorder %s48, 1
      %p118 = por %p116, %p117
      %p120 = scmp.ne.s32.totalorder %s105, %s119
      %p121 = scmp.eq.s32.totalorder %s48, 0
      %p122 = por %p120, %p121
      %s124 = sadd.s32 %s123, 1
      %p127 = scmp.eq.s32.totalorder %s42, 1
      %p128 = scmp.ne.s32.totalorder %s123, %s125
      %p129 = scmp.eq.s32.totalorder %s42, 0
      %p130 = por %p128, %p129
      %p131 = scmp.ne.s32.totalorder %s123, %s125
      %p132 = scmp.eq.s32.totalorder %s47, 1
      %p133 = por %p131, %p132
      %p134 = scmp.ne.s32.totalorder %s125, %s126
      %p135 = scmp.eq.s32.totalorder %s47, 0
      %p136 = por %p134, %p135
      %p137 = scmp.ne.s32.totalorder %s125, %s126
      %p138 = scmp.eq.s32.totalorder %s48, 1
      %p139 = por %p137, %p138
      %p141 = scmp.ne.s32.totalorder %s126, %s140
      %p142 = scmp.eq.s32.totalorder %s48, 0
      %p143 = por %p141, %p142
      %s145 = sadd.s32 %s144, 1
      %p148 = scmp.eq.s32.totalorder %s42, 1
      %p149 = scmp.ne.s32.totalorder %s144, %s146
      %p150 = scmp.eq.s32.totalorder %s42, 0
      %p151 = por %p149, %p150
      %p152 = scmp.ne.s32.totalorder %s144, %s146
      %p153 = scmp.eq.s32.totalorder %s47, 1
      %p154 = por %p152, %p153
      %p155 = scmp.ne.s32.totalorder %s146, %s147
      %p156 = scmp.eq.s32.totalorder %s47, 0
      %p157 = por %p155, %p156
      %p158 = scmp.ne.s32.totalorder %s146, %s147
      %p159 = scmp.eq.s32.totalorder %s48, 1
      %p160 = por %p158, %p159
      %p162 = scmp.ne.s32.totalorder %s147, %s161
      %p163 = scmp.eq.s32.totalorder %s48, 0
      %p164 = por %p162, %p163
      %s166 = sadd.s32 %s165, 1
      %p169 = scmp.eq.s32.totalorder %s42, 1
      %p170 = scmp.ne.s32.totalorder %s165, %s167
      %p171 = scmp.eq.s32.totalorder %s42, 0
      %p172 = por %p170, %p171
      %p173 = scmp.ne.s32.totalorder %s165, %s167
      %p174 = scmp.eq.s32.totalorder %s47, 1
      %p175 = por %p173, %p174
      %p176 = scmp.ne.s32.totalorder %s167, %s168
      %p177 = scmp.eq.s32.totalorder %s47, 0
      %p178 = por %p176, %p177
      %p179 = scmp.ne.s32.totalorder %s167, %s168
      %p180 = scmp.eq.s32.totalorder %s48, 1
      %p181 = por %p179, %p180
      %p183 = scmp.ne.s32.totalorder %s168, %s182
      %p184 = scmp.eq.s32.totalorder %s48, 0
      %p185 = por %p183, %p184
      %s187 = sadd.s32 %s186, 1
      %p190 = scmp.eq.s32.totalorder %s42, 1
      %p191 = scmp.ne.s32.totalorder %s186, %s188
      %p192 = scmp.eq.s32.totalorder %s42, 0
      %p193 = por %p191, %p192
      %p194 = scmp.ne.s32.totalorder %s186, %s188
      %p195 = scmp.eq.s32.totalorder %s47, 1
      %p196 = por %p194, %p195
      %p197 = scmp.ne.s32.totalorder %s188, %s189
      %p198 = scmp.eq.s32.totalorder %s47, 0
      %p199 = por %p197, %p198
      %p200 = scmp.ne.s32.totalorder %s188, %s189
      %p201 = scmp.eq.s32.totalorder %s48, 1
      %p202 = por %p200, %p201
      %p204 = scmp.ne.s32.totalorder %s189, %s203
      %p205 = scmp.eq.s32.totalorder %s48, 0
      %p206 = por %p204, %p205
      %s208 = sadd.s32 %s207, 1
      %p211 = scmp.eq.s32.totalorder %s42, 1
      %p212 = scmp.ne.s32.totalorder %s207, %s209
      %p213 = scmp.eq.s32.totalorder %s42, 0
      %p214 = por %p212, %p213
      %p215 = scmp.ne.s32.totalorder %s207, %s209
      %p216 = scmp.eq.s32.totalorder %s47, 1
      %p217 = por %p215, %p216
      %p218 = scmp.ne.s32.totalorder %s209, %s210
      %p219 = scmp.eq.s32.totalorder %s47, 0
      %p220 = por %p218, %p219
      %p221 = scmp.ne.s32.totalorder %s209, %s210
      %p222 = scmp.eq.s32.totalorder %s48, 1
      %p223 = por %p221, %p222
      %p225 = scmp.ne.s32.totalorder %s210, %s224
      %p226 = scmp.eq.s32.totalorder %s48, 0
      %p227 = por %p225, %p226
      %s229 = sadd.s32 %s228, 1
      %p232 = scmp.eq.s32.totalorder %s42, 1
      %p233 = scmp.ne.s32.totalorder %s228, %s230
      %p234 = scmp.eq.s32.totalorder %s42, 0
      %p235 = por %p233, %p234
      %p236 = scmp.ne.s32.totalorder %s228, %s230
      %p237 = scmp.eq.s32.totalorder %s47, 1
      %p238 = por %p236, %p237
      %p239 = scmp.ne.s32.totalorder %s230, %s231
      %p240 = scmp.eq.s32.totalorder %s47, 0
      %p241 = por %p239, %p240
      %p242 = scmp.ne.s32.totalorder %s230, %s231
      %p243 = scmp.eq.s32.totalorder %s48, 1
      %p244 = por %p242, %p243
      %p246 = scmp.ne.s32.totalorder %s231, %s245
      %p247 = scmp.eq.s32.totalorder %s48, 0
      %p248 = por %p246, %p247
      %s250 = sadd.s32 %s249, 1
      %p253 = scmp.eq.s32.totalorder %s42, 1
      %p254 = scmp.ne.s32.totalorder %s249, %s251
      %p255 = scmp.eq.s32.totalorder %s42, 0
      %p256 = por %p254, %p255
      %p257 = scmp.ne.s32.totalorder %s249, %s251
      %p258 = scmp.eq.s32.totalorder %s47, 1
      %p259 = por %p257, %p258
      %p260 = scmp.ne.s32.totalorder %s251, %s252
      %p261 = scmp.eq.s32.totalorder %s47, 0
      %p262 = por %p260, %p261
      %p263 = scmp.ne.s32.totalorder %s251, %s252
      %p264 = scmp.eq.s32.totalorder %s48, 1
      %p265 = por %p263, %p264
      %p267 = scmp.ne.s32.totalorder %s252, %s266
      %p268 = scmp.eq.s32.totalorder %s48, 0
      %p269 = por %p267, %p268
      %s271 = sadd.s32 %s270, 1
      %p274 = scmp.eq.s32.totalorder %s42, 1
      %p275 = scmp.ne.s32.totalorder %s270, %s272
      %p276 = scmp.eq.s32.totalorder %s42, 0
      %p277 = por %p275, %p276
      %p278 = scmp.ne.s32.totalorder %s270, %s272
      %p279 = scmp.eq.s32.totalorder %s47, 1
      %p280 = por %p278, %p279
      %p281 = scmp.ne.s32.totalorder %s272, %s273
      %p282 = scmp.eq.s32.totalorder %s47, 0
      %p283 = por %p281, %p282
      %p284 = scmp.ne.s32.totalorder %s272, %s273
      %p285 = scmp.eq.s32.totalorder %s48, 1
      %p286 = por %p284, %p285
      %p288 = scmp.ne.s32.totalorder %s273, %s287
      %p289 = scmp.eq.s32.totalorder %s48, 0
      %p290 = por %p288, %p289
      %s292 = sadd.s32 %s291, 1
      %p295 = scmp.eq.s32.totalorder %s42, 1
      %p296 = scmp.ne.s32.totalorder %s291, %s293
      %p297 = scmp.eq.s32.totalorder %s42, 0
      %p298 = por %p296, %p297
      %p299 = scmp.ne.s32.totalorder %s291, %s293
      %p300 = scmp.eq.s32.totalorder %s47, 1
      %p301 = por %p299, %p300
      %p302 = scmp.ne.s32.totalorder %s293, %s294
      %p303 = scmp.eq.s32.totalorder %s47, 0
      %p304 = por %p302, %p303
      %p305 = scmp.ne.s32.totalorder %s293, %s294
      %p306 = scmp.eq.s32.totalorder %s48, 1
      %p307 = por %p305, %p306
      %p309 = scmp.ne.s32.totalorder %s294, %s308
      %p310 = scmp.eq.s32.totalorder %s48, 0
      %p311 = por %p309, %p310
      %s313 = sadd.s32 %s312, 1
      %p316 = scmp.eq.s32.totalorder %s42, 1
      %p317 = scmp.ne.s32.totalorder %s312, %s314
      %p318 = scmp.eq.s32.totalorder %s42, 0
      %p319 = por %p317, %p318
      %p320 = scmp.ne.s32.totalorder %s312, %s314
      %p321 = scmp.eq.s32.totalorder %s47, 1
      %p322 = por %p320, %p321
      %p323 = scmp.ne.s32.totalorder %s314, %s315
      %p324 = scmp.eq.s32.totalorder %s47, 0
      %p325 = por %p323, %p324
      %p326 = scmp.ne.s32.totalorder %s314, %s315
      %p327 = scmp.eq.s32.totalorder %s48, 1
      %p328 = por %p326, %p327
      %p330 = scmp.ne.s32.totalorder %s315, %s329
      %p331 = scmp.eq.s32.totalorder %s48, 0
      %p332 = por %p330, %p331
      %s334 = sadd.s32 %s333, 1
      %p337 = scmp.eq.s32.totalorder %s42, 1
      %p338 = scmp.ne.s32.totalorder %s333, %s335
      %p339 = scmp.eq.s32.totalorder %s42, 0
      %p340 = por %p338, %p339
      %p341 = scmp.ne.s32.totalorder %s333, %s335
      %p342 = scmp.eq.s32.totalorder %s47, 1
      %p343 = por %p341, %p342
      %p344 = scmp.ne.s32.totalorder %s335, %s336
      %p345 = scmp.eq.s32.totalorder %s47, 0
      %p346 = por %p344, %p345
      %p347 = scmp.ne.s32.totalorder %s335, %s336
      %p348 = scmp.eq.s32.totalorder %s48, 1
      %p349 = por %p347, %p348
      %p351 = scmp.ne.s32.totalorder %s336, %s350
      %p352 = scmp.eq.s32.totalorder %s48, 0
      %p353 = por %p351, %p352
      %s355 = sadd.s32 %s354, 1
      %p358 = scmp.eq.s32.totalorder %s42, 1
      %p359 = scmp.ne.s32.totalorder %s354, %s356
      %p360 = scmp.eq.s32.totalorder %s42, 0
      %p361 = por %p359, %p360
      %p362 = scmp.ne.s32.totalorder %s354, %s356
      %p363 = scmp.eq.s32.totalorder %s47, 1
      %p364 = por %p362, %p363
      %p365 = scmp.ne.s32.totalorder %s356, %s357
      %p366 = scmp.eq.s32.totalorder %s47, 0
      %p367 = por %p365, %p366
      %p368 = scmp.ne.s32.totalorder %s356, %s357
      %p369 = scmp.eq.s32.totalorder %s48, 1
      %p370 = por %p368, %p369
      %p372 = scmp.ne.s32.totalorder %s357, %s371
      %p373 = scmp.eq.s32.totalorder %s48, 0
      %p374 = por %p372, %p373
      %s375 = ssub.s32 %s42, %s49
      %p376 = scmp.eq.s32.totalorder %s375, 0
      %s378 = sadd.s32 %s377, 1
      %s379 = scalar_select %p376, %s377, %s378
      %p382 = pneg %p376
      %p383 = scmp.eq.s32.totalorder %s42, 1
      %p384 = por %p382, %p383
      %p385 = scmp.ne.s32.totalorder %s377, %s380
      %p386 = scmp.eq.s32.totalorder %s42, 0
      %p387 = por %p385, %p386
      %p388 = scmp.ne.s32.totalorder %s377, %s380
      %p389 = scmp.eq.s32.totalorder %s47, 1
      %p390 = por %p388, %p389
      %p391 = scmp.ne.s32.totalorder %s380, %s381
      %p392 = scmp.eq.s32.totalorder %s47, 0
      %p393 = por %p391, %p392
      %p394 = scmp.ne.s32.totalorder %s380, %s381
      %p395 = scmp.eq.s32.totalorder %s48, 1
      %p396 = por %p394, %p395
      %p398 = scmp.ne.s32.totalorder %s381, %s397
      %p399 = scmp.eq.s32.totalorder %s48, 0
      %p400 = por %p398, %p399
      %s401 = ssub.s32 %s42, %s49
      %p402 = scmp.eq.s32.totalorder %s401, 0
      %s404 = sadd.s32 %s403, 1
      %s405 = scalar_select %p402, %s403, %s404
      %p408 = pneg %p402
      %p409 = scmp.eq.s32.totalorder %s42, 1
      %p410 = por %p408, %p409
      %p411 = scmp.ne.s32.totalorder %s403, %s406
      %p412 = scmp.eq.s32.totalorder %s42, 0
      %p413 = por %p411, %p412
      %p414 = scmp.ne.s32.totalorder %s403, %s406
      %p415 = scmp.eq.s32.totalorder %s47, 1
      %p416 = por %p414, %p415
      %p417 = scmp.ne.s32.totalorder %s406, %s407
      %p418 = scmp.eq.s32.totalorder %s47, 0
      %p419 = por %p417, %p418
      %p420 = scmp.ne.s32.totalorder %s406, %s407
      %p421 = scmp.eq.s32.totalorder %s48, 1
      %p422 = por %p420, %p421
      %p424 = scmp.ne.s32.totalorder %s407, %s423
      %p425 = scmp.eq.s32.totalorder %s48, 0
      %p426 = por %p424, %p425
      %s427 = ssub.s32 %s42, %s49
      %p428 = scmp.eq.s32.totalorder %s427, 0
      %s430 = sadd.s32 %s429, 1
      %s431 = scalar_select %p428, %s429, %s430
      %p434 = pneg %p428
      %p435 = scmp.eq.s32.totalorder %s42, 1
      %p436 = por %p434, %p435
      %p437 = scmp.ne.s32.totalorder %s429, %s432
      %p438 = scmp.eq.s32.totalorder %s42, 0
      %p439 = por %p437, %p438
      %p440 = scmp.ne.s32.totalorder %s429, %s432
      %p441 = scmp.eq.s32.totalorder %s47, 1
      %p442 = por %p440, %p441
      %p443 = scmp.ne.s32.totalorder %s432, %s433
      %p444 = scmp.eq.s32.totalorder %s47, 0
      %p445 = por %p443, %p444
      %p446 = scmp.ne.s32.totalorder %s432, %s433
      %p447 = scmp.eq.s32.totalorder %s48, 1
      %p448 = por %p446, %p447
      %p450 = scmp.ne.s32.totalorder %s433, %s449
      %p451 = scmp.eq.s32.totalorder %s48, 0
      %p452 = por %p450, %p451
      %s453 = ssub.s32 %s42, %s49
      %p454 = scmp.eq.s32.totalorder %s453, 0
      %s456 = sadd.s32 %s455, 1
      %s457 = scalar_select %p454, %s455, %s456
      %p460 = pneg %p454
      %p461 = scmp.eq.s32.totalorder %s42, 1
      %p462 = por %p460, %p461
      %p463 = scmp.ne.s32.totalorder %s455, %s458
      %p464 = scmp.eq.s32.totalorder %s42, 0
      %p465 = por %p463, %p464
      %p466 = scmp.ne.s32.totalorder %s455, %s458
      %p467 = scmp.eq.s32.totalorder %s47, 1
      %p468 = por %p466, %p467
      %p469 = scmp.ne.s32.totalorder %s458, %s459
      %p470 = scmp.eq.s32.totalorder %s47, 0
      %p471 = por %p469, %p470
      %p472 = scmp.ne.s32.totalorder %s458, %s459
      %p473 = scmp.eq.s32.totalorder %s48, 1
      %p474 = por %p472, %p473
      %p476 = scmp.ne.s32.totalorder %s459, %s475
      %p477 = scmp.eq.s32.totalorder %s48, 0
      %p478 = por %p476, %p477
      %s479 = ssub.s32 %s42, %s49
      %p480 = scmp.eq.s32.totalorder %s479, 0
      %s482 = sadd.s32 %s481, 1
      %s483 = scalar_select %p480, %s481, %s482
      %p486 = pneg %p480
      %p487 = scmp.eq.s32.totalorder %s42, 1
      %p488 = por %p486, %p487
      %p489 = scmp.ne.s32.totalorder %s481, %s484
      %p490 = scmp.eq.s32.totalorder %s42, 0
      %p491 = por %p489, %p490
      %p492 = scmp.ne.s32.totalorder %s481, %s484
      %p493 = scmp.eq.s32.totalorder %s47, 1
      %p494 = por %p492, %p493
      %p495 = scmp.ne.s32.totalorder %s484, %s485
      %p496 = scmp.eq.s32.totalorder %s47, 0
      %p497 = por %p495, %p496
      %p498 = scmp.ne.s32.totalorder %s484, %s485
      %p499 = scmp.eq.s32.totalorder %s48, 1
      %p500 = por %p498, %p499
      %p502 = scmp.ne.s32.totalorder %s485, %s501
      %p503 = scmp.eq.s32.totalorder %s48, 0
      %p504 = por %p502, %p503
      %p505 = scmp.le.s32.totalorder 1, %s42
      %p506 = scmp.lt.s32.totalorder %s42, 3
      %p507 = pnand %p505, %p506
      %p508 = pneg %p507
      // Predicated region
      $region9: #{tpu_custom_call.1} parent=5 // pred_check
        _
      $region10: #{tpu_custom_call.1} parent=5 // pred_check_branch
        %510 = sbr.rel (%p507) target = $region12
      $region11: #{tpu_custom_call.1} parent=5 // pred_region
        %s511 = ssub.s32 %s42, 1
        // Predicated region
        $region13: #{tpu_custom_call.1} parent=11 // pred_check
          %p512 = pneg %p115
        $region14: #{tpu_custom_call.1} parent=11 // pred_check_branch
          %514 = sbr.rel (%p512) target = $region16
        $region15: #{tpu_custom_call.1} parent=11 // pred_region
          _
        $region16: #{tpu_custom_call.1} parent=11 // pred_fallthru
          _
        // Predicated region
        $region17: #{tpu_custom_call.1} parent=11 // pred_check
          %p515 = pneg %p136
        $region18: #{tpu_custom_call.1} parent=11 // pred_check_branch
          %517 = sbr.rel (%p515) target = $region20
        $region19: #{tpu_custom_call.1} parent=11 // pred_region
          _
        $region20: #{tpu_custom_call.1} parent=11 // pred_fallthru
          _
        // Predicated region
        $region21: #{tpu_custom_call.1} parent=11 // pred_check
          %p518 = pneg %p157
        $region22: #{tpu_custom_call.1} parent=11 // pred_check_branch
          %520 = sbr.rel (%p518) target = $region24
        $region23: #{tpu_custom_call.1} parent=11 // pred_region
          _
        $region24: #{tpu_custom_call.1} parent=11 // pred_fallthru
          _
        // Predicated region
        $region25: #{tpu_custom_call.1} parent=11 // pred_check
          %p521 = pneg %p178
        $region26: #{tpu_custom_call.1} parent=11 // pred_check_branch
          %523 = sbr.rel (%p521) target = $region28
        $region27: #{tpu_custom_call.1} parent=11 // pred_region
          _
        $region28: #{tpu_custom_call.1} parent=11 // pred_fallthru
          _
        // Predicated region
        $region29: #{tpu_custom_call.1} parent=11 // pred_check
          %p524 = pneg %p199
        $region30: #{tpu_custom_call.1} parent=11 // pred_check_branch
          %526 = sbr.rel (%p524) target = $region32
        $region31: #{tpu_custom_call.1} parent=11 // pred_region
          _
        $region32: #{tpu_custom_call.1} parent=11 // pred_fallthru
          _
        // Predicated region
        $region33: #{tpu_custom_call.1} parent=11 // pred_check
          %p527 = pneg %p220
        $region34: #{tpu_custom_call.1} parent=11 // pred_check_branch
          %529 = sbr.rel (%p527) target = $region36
        $region35: #{tpu_custom_call.1} parent=11 // pred_region
          %s531 = ssub.s32 4096, 4096
          %532 = vsyncadd [#allocation6], %s531
          %s533 = sshll.u32 [#allocation7], 4
          %s534 = int_to_ptr.vmem [resolvable:$true] %s533
          %539 = dma.hbm_to_vmem [thread:$0]  %s7, 4096, %s534, [#allocation6], 128, 128, 8
        $region36: #{tpu_custom_call.1} parent=11 // pred_fallthru
          _
        // Predicated region
        $region37: #{tpu_custom_call.1} parent=11 // pred_check
          %p540 = pneg %p241
        $region38: #{tpu_custom_call.1} parent=11 // pred_check_branch
          %542 = sbr.rel (%p540) target = $region40
        $region39: #{tpu_custom_call.1} parent=11 // pred_region
          _
        $region40: #{tpu_custom_call.1} parent=11 // pred_fallthru
          _
        // Predicated region
        $region41: #{tpu_custom_call.1} parent=11 // pred_check
          %p543 = pneg %p262
        $region42: #{tpu_custom_call.1} parent=11 // pred_check_branch
          %545 = sbr.rel (%p543) target = $region44
        $region43: #{tpu_custom_call.1} parent=11 // pred_region
          %s547 = ssub.s32 4096, 4096
          %548 = vsyncadd [#allocation9], %s547
          %s549 = sshll.u32 [#allocation8], 4
          %s550 = int_to_ptr.vmem [resolvable:$true] %s549
          %555 = dma.hbm_to_vmem [thread:$0]  %s9, 4096, %s550, [#allocation9], 128, 128, 8
        $region44: #{tpu_custom_call.1} parent=11 // pred_fallthru
          _
        // Predicated region
        $region45: #{tpu_custom_call.1} parent=11 // pred_check
          %p556 = pneg %p283
        $region46: #{tpu_custom_call.1} parent=11 // pred_check_branch
          %558 = sbr.rel (%p556) target = $region48
        $region47: #{tpu_custom_call.1} parent=11 // pred_region
          _
        $region48: #{tpu_custom_call.1} parent=11 // pred_fallthru
          _
        // Predicated region
        $region49: #{tpu_custom_call.1} parent=11 // pred_check
          %p559 = pneg %p304
        $region50: #{tpu_custom_call.1} parent=11 // pred_check_branch
          %561 = sbr.rel (%p559) target = $region52
        $region51: #{tpu_custom_call.1} parent=11 // pred_region
          %s563 = ssub.s32 2048, 2048
          %564 = vsyncadd [#allocation9], %s563
          %s565 = sshll.u32 [#allocation10], 4
          %s566 = int_to_ptr.vmem [resolvable:$true] %s565
          %571 = dma.hbm_to_vmem [thread:$0]  %s11, 2048, %s566, [#allocation9], 128, 128, 8
        $region52: #{tpu_custom_call.1} parent=11 // pred_fallthru
          _
        // Predicated region
        $region53: #{tpu_custom_call.1} parent=11 // pred_check
          %p572 = pneg %p325
        $region54: #{tpu_custom_call.1} parent=11 // pred_check_branch
          %574 = sbr.rel (%p572) target = $region56
        $region55: #{tpu_custom_call.1} parent=11 // pred_region
          _
        $region56: #{tpu_custom_call.1} parent=11 // pred_fallthru
          _
        // Predicated region
        $region57: #{tpu_custom_call.1} parent=11 // pred_check
          %p575 = pneg %p346
        $region58: #{tpu_custom_call.1} parent=11 // pred_check_branch
          %577 = sbr.rel (%p575) target = $region60
        $region59: #{tpu_custom_call.1} parent=11 // pred_region
          _
        $region60: #{tpu_custom_call.1} parent=11 // pred_fallthru
          _
        // Predicated region
        $region61: #{tpu_custom_call.1} parent=11 // pred_check
          %p578 = pneg %p367
        $region62: #{tpu_custom_call.1} parent=11 // pred_check_branch
          %580 = sbr.rel (%p578) target = $region64
        $region63: #{tpu_custom_call.1} parent=11 // pred_region
          _
        $region64: #{tpu_custom_call.1} parent=11 // pred_fallthru
          _
      $region12: #{tpu_custom_call.1} parent=5 // pred_fallthru
        _
      %p581 = scmp.lt.s32.totalorder %s42, 2
      // Predicated region
      $region65: #{tpu_custom_call.1} parent=5 // pred_check
        %p582 = pneg %p581
      $region66: #{tpu_custom_call.1} parent=5 // pred_check_branch
        %584 = sbr.rel (%p582) target = $region68
      $region67: #{tpu_custom_call.1} parent=5 // pred_region
        // Predicated region
        $region69: #{tpu_custom_call.1} parent=67 // pred_check
          %p585 = pneg %p62
        $region70: #{tpu_custom_call.1} parent=67 // pred_check_branch
          %587 = sbr.rel (%p585) target = $region72
        $region71: #{tpu_custom_call.1} parent=67 // pred_region
          %s588 = sand.u32 %s52, 1
          %s589 = scalar_lea.sflag [#allocation3], %s588
          %s590 = sand.u32 %s52, 1
          %s591 = smul.addr %s590, 16
          %s592 = scalar_lea.vmem [#allocation2], %s591
          %s594 = ssub.s32 256, 256
          %595 = vsyncadd %s589, %s594
          %s596 = smul.addr %s42, 2
          %s597 = smul.addr %s596, 128
          %s598 = scalar_lea.hbm %s0, %s597
          %s600 = sshll.u32 %s592, 4
          %s601 = int_to_ptr.vmem [resolvable:$true] %s600
          %603 = dma.hbm_to_vmem [thread:$0]  %s598, 256, %s601, %s589
        $region72: #{tpu_custom_call.1} parent=67 // pred_fallthru
          _
        // Predicated region
        $region73: #{tpu_custom_call.1} parent=67 // pred_check
          %p604 = pneg %p88
        $region74: #{tpu_custom_call.1} parent=67 // pred_check_branch
          %606 = sbr.rel (%p604) target = $region76
        $region75: #{tpu_custom_call.1} parent=67 // pred_region
          %s607 = sand.u32 %s42, 1
          %s608 = scalar_lea.sflag [#allocation6], %s607
          %s609 = sand.u32 %s78, 1
          %s610 = smul.addr %s609, 8
          %s611 = scalar_lea.vmem [#allocation5], %s610
          %s613 = ssub.s32 128, 128
          %614 = vsyncadd %s608, %s613
          %s615 = smul.addr %s42, 128
          %s616 = scalar_lea.hbm %s1, %s615
          %s618 = sshll.u32 %s611, 4
          %s619 = int_to_ptr.vmem [resolvable:$true] %s618
          %621 = dma.hbm_to_vmem [thread:$0]  %s616, 128, %s619, %s608
        $region76: #{tpu_custom_call.1} parent=67 // pred_fallthru
          _
      $region68: #{tpu_custom_call.1} parent=5 // pred_fallthru
        _
      %p622 = scmp.le.s32.totalorder 1, %s42
      %p623 = scmp.lt.s32.totalorder %s42, 3
      %p624 = pnand %p622, %p623
      %p625 = pneg %p624
      // Predicated region
      $region77: #{tpu_custom_call.1} parent=5 // pred_check
        _
      $region78: #{tpu_custom_call.1} parent=5 // pred_check_branch
        %627 = sbr.rel (%p624) target = $region80
      $region79: #{tpu_custom_call.1} parent=5 // pred_region
        %s628 = ssub.s32 %s42, 1
        %s629 = sand.u32 %s55, 1
        %s630 = scalar_lea.sflag [#allocation3], %s629
        %s631 = sand.u32 %s55, 1
        %s632 = smul.addr %s631, 16
        %s633 = scalar_lea.vmem [#allocation2], %s632
        // Predicated region
        $region81: #{tpu_custom_call.1} parent=79 // pred_check
          %p634 = pneg %p68
        $region82: #{tpu_custom_call.1} parent=79 // pred_check_branch
          %636 = sbr.rel (%p634) target = $region84
        $region83: #{tpu_custom_call.1} parent=79 // pred_region
          %637 = dma.done %s630, 256
        $region84: #{tpu_custom_call.1} parent=79 // pred_fallthru
          _
        %s638 = sand.u32 %s47, 1
        %s639 = scalar_lea.sflag [#allocation6], %s638
        %s640 = sand.u32 %s81, 1
        %s641 = smul.addr %s640, 8
        %s642 = scalar_lea.vmem [#allocation5], %s641
        // Predicated region
        $region85: #{tpu_custom_call.1} parent=79 // pred_check
          %p643 = pneg %p94
        $region86: #{tpu_custom_call.1} parent=79 // pred_check_branch
          %645 = sbr.rel (%p643) target = $region88
        $region87: #{tpu_custom_call.1} parent=79 // pred_region
          %646 = dma.done %s639, 128
        $region88: #{tpu_custom_call.1} parent=79 // pred_fallthru
          _
        // Predicated region
        $region89: #{tpu_custom_call.1} parent=79 // pred_check
          %p647 = pneg %p220
        $region90: #{tpu_custom_call.1} parent=79 // pred_check_branch
          %649 = sbr.rel (%p647) target = $region92
        $region91: #{tpu_custom_call.1} parent=79 // pred_region
          %650 = dma.done [#allocation6], 4096
        $region92: #{tpu_custom_call.1} parent=79 // pred_fallthru
          _
        // Predicated region
        $region93: #{tpu_custom_call.1} parent=79 // pred_check
          %p651 = pneg %p262
        $region94: #{tpu_custom_call.1} parent=79 // pred_check_branch
          %653 = sbr.rel (%p651) target = $region96
        $region95: #{tpu_custom_call.1} parent=79 // pred_region
          %654 = dma.done [#allocation9], 4096
        $region96: #{tpu_custom_call.1} parent=79 // pred_fallthru
          _
        // Predicated region
        $region97: #{tpu_custom_call.1} parent=79 // pred_check
          %p655 = pneg %p304
        $region98: #{tpu_custom_call.1} parent=79 // pred_check_branch
          %657 = sbr.rel (%p655) target = $region100
        $region99: #{tpu_custom_call.1} parent=79 // pred_region
          %658 = dma.done [#allocation9], 2048
        $region100: #{tpu_custom_call.1} parent=79 // pred_fallthru
          _
        %s659 = sand.u32 %s55, 1
        %s660 = scalar_lea.sflag [#allocation3], %s659
        %s661 = sand.u32 %s55, 1
        %s662 = smul.addr %s661, 16
        %s663 = scalar_lea.vmem [#allocation2], %s662
        %p664 = pneg %p68
        %p665 = pneg %p65
        %s666 = sand.u32 %s47, 1
        %s667 = scalar_lea.sflag [#allocation6], %s666
        %s668 = sand.u32 %s81, 1
        %s669 = smul.addr %s668, 8
        %s670 = scalar_lea.vmem [#allocation5], %s669
        %p671 = pneg %p94
        %p672 = pneg %p91
        %p673 = pneg %p115
        %p674 = pneg %p112
        %p675 = pneg %p136
        %p676 = pneg %p133
        %p677 = pneg %p157
        %p678 = pneg %p154
        %p679 = pneg %p178
        %p680 = pneg %p175
        %p681 = pneg %p199
        %p682 = pneg %p196
        %p683 = pneg %p220
        %p684 = pneg %p217
        %p685 = pneg %p241
        %p686 = pneg %p238
        %p687 = pneg %p262
        %p688 = pneg %p259
        %p689 = pneg %p283
        %p690 = pneg %p280
        %p691 = pneg %p304
        %p692 = pneg %p301
        %p693 = pneg %p325
        %p694 = pneg %p322
        %p695 = pneg %p346
        %p696 = pneg %p343
        %p697 = pneg %p367
        %p698 = pneg %p364
        %p699 = pneg %p393
        %p700 = pneg %p390
        %s701 = sand.u32 %s380, 1
        %s702 = scalar_lea.sflag [#allocation4], %s701
        %s703 = sand.u32 %s380, 1
        %s704 = smul.addr %s703, 8
        %s705 = scalar_lea.vmem [#allocation11], %s704
        %p706 = pneg %p419
        %p707 = pneg %p416
        %s708 = sand.u32 %s47, 1
        %s709 = scalar_lea.sflag [#allocation13], %s708
        %s710 = sand.u32 %s406, 1
        %s711 = smul.addr %s710, 8
        %s712 = scalar_lea.vmem [#allocation12], %s711
        %p713 = pneg %p445
        %p714 = pneg %p442
        %s715 = sand.u32 %s47, 1
        %s716 = scalar_lea.sflag [#allocation13], %s715
        %s717 = sand.u32 %s432, 1
        %s718 = smul.addr %s717, 8
        %s719 = scalar_lea.vmem [#allocation14], %s718
        %p720 = pneg %p471
        %p721 = pneg %p468
        %s722 = sand.u32 %s47, 1
        %s723 = scalar_lea.sflag [#allocation16], %s722
        %s724 = sand.u32 %s458, 1
        %s725 = smul.addr %s724, 8
        %s726 = scalar_lea.vmem [#allocation15], %s725
        %p727 = pneg %p497
        %p728 = pneg %p494
        %s729 = sand.u32 %s47, 1
        %s730 = scalar_lea.sflag [#allocation16], %s729
        %s731 = sand.u32 %s484, 1
        %s732 = smul.addr %s731, 8
        %s733 = scalar_lea.vmem [#allocation17], %s732
        %v734 = vld [vmem:[%s633] sm:$0xff]
        %v735 = vld [vmem:[%s633 + $0x8] sm:$0xff]
        %v736 = vld [vmem:[%s2] sm:$0xff]
        %v737 = vld [vmem:[%s2 + $0x8] sm:$0xff]
        %v738 = vld [vmem:[%s2 + $0x10] sm:$0xff]
        %v739 = vld [vmem:[%s2 + $0x18] sm:$0xff]
        %v740 = vld [vmem:[%s2 + $0x20] sm:$0xff]
        %v741 = vld [vmem:[%s2 + $0x28] sm:$0xff]
        %v742 = vld [vmem:[%s2 + $0x30] sm:$0xff]
        %v743 = vld [vmem:[%s2 + $0x38] sm:$0xff]
        %v744 = vld [vmem:[%s2 + $0x40] sm:$0xff]
        %v745 = vld [vmem:[%s2 + $0x48] sm:$0xff]
        %v746 = vld [vmem:[%s2 + $0x50] sm:$0xff]
        %v747 = vld [vmem:[%s2 + $0x58] sm:$0xff]
        %v748 = vld [vmem:[%s2 + $0x60] sm:$0xff]
        %v749 = vld [vmem:[%s2 + $0x68] sm:$0xff]
        %v750 = vld [vmem:[%s2 + $0x70] sm:$0xff]
        %v751 = vld [vmem:[%s2 + $0x78] sm:$0xff]
        %v752 = vld [vmem:[%s2 + $0x80] sm:$0xff]
        %v753 = vld [vmem:[%s2 + $0x88] sm:$0xff]
        %v754 = vld [vmem:[%s2 + $0x90] sm:$0x3f]
        %vm755 = vcmask 179200
        %v757 = vsel %vm755, %v735, 0
        %vm759 = vcmask 1045504
        %v761 = vsel %vm759, %v754, 0
        %763 = vmatprep.subr.mxu0 0.0
        %764 = vmatpush1.msra.mxu0 %v736
        %765 = vmatprep.subr.mxu0 0.0
        %766 = vmatpush1.msra.mxu0 %v737
        %767 = vmatprep.subr.mxu0 0.0
        %768 = vmatpush1.msra.mxu0 %v738
        %769 = vmatprep.subr.mxu0 0.0
        %770 = vmatpush1.msra.mxu0 %v739
        %771 = vmatprep.subr.mxu0 0.0
        %772 = vmatpush1.msra.mxu0 %v740
        %773 = vmatprep.subr.mxu0 0.0
        %774 = vmatpush1.msra.mxu0 %v741
        %775 = vmatprep.subr.mxu0 0.0
        %776 = vmatpush1.msra.mxu0 %v742
        %777 = vmatprep.subr.mxu0 0.0
        %778 = vmatpush1.msra.mxu0 %v743
        %779 = vmatprep.subr.mxu0 0.0
        %780 = vmatpush1.msra.mxu0 %v744
        %781 = vmatprep.subr.mxu0 0.0
        %782 = vmatpush1.msra.mxu0 %v745
        %783 = vmatprep.subr.mxu0 0.0
        %784 = vmatpush1.msra.mxu0 %v746
        %785 = vmatprep.subr.mxu0 0.0
        %786 = vmatpush1.msra.mxu0 %v747
        %787 = vmatprep.subr.mxu0 0.0
        %788 = vmatpush1.msra.mxu0 %v748
        %789 = vmatprep.subr.mxu0 0.0
        %790 = vmatpush1.msra.mxu0 %v749
        %791 = vmatprep.subr.mxu0 0.0
        %792 = vmatpush1.msra.mxu0 %v750
        %793 = vmatprep.subr.mxu0 0.0
        %794 = vmatpush1.msra.mxu0 %v751
        %795 = vmatprep.subr.mxu0 0.0
        %796 = vmatpush1.msra.mxu0 %v752
        %797 = vmatprep.subr.mxu0 0.0
        %798 = vmatpush1.msra.mxu0 %v753
        %799 = vmatprep.subr.mxu0 0.0
        %800 = vmatpush1.msra.mxu0 %v761
        %801 = vmatprep.subr.mxu0 0.0
        %802 = vmatpush1.msra.mxu0 0.0
        %803 = vmatprep.subr.mxu0 0.0
        %804 = vmatpush1.msra.mxu0 0.0
        %805 = vmatprep.subr.mxu0 0.0
        %806 = vmatpush1.msra.mxu0 0.0
        %807 = vmatprep.subr.mxu0 0.0
        %808 = vmatpush1.msra.mxu0 0.0
        %809 = vmatprep.subr.mxu0 0.0
        %810 = vmatpush1.msra.mxu0 0.0
        %811 = vmatprep.subr.mxu0 0.0
        %812 = vmatpush1.msra.mxu0 0.0
        %813 = vmatprep.subr.mxu0 0.0
        %814 = vmatpush1.msra.mxu0 0.0
        %815 = vmatprep.subr.mxu0 0.0
        %816 = vmatpush1.msra.mxu0 0.0
        %817 = vmatprep.subr.mxu0 0.0
        %818 = vmatpush1.msra.mxu0 0.0
        %819 = vmatprep.subr.mxu0 0.0
        %820 = vmatpush1.msra.mxu0 0.0
        %821 = vmatprep.subr.mxu0 0.0
        %822 = vmatpush1.msra.mxu0 0.0
        %823 = vmatprep.subr.mxu0 0.0
        %824 = vmatpush1.msra.mxu0 0.0
        %825 = vmatprep.subr.mxu0 0.0
        %826 = vmatpush1.msra.mxu0 0.0
        %827 = vmatprep.mubr.f32.mxu0 %v757
        %828 = vmatmul.mubr.f32.gmra.mrb[0].mxu0 %v734
        %v829 = vpop.f32.mrb[0].mxu0
        %v830 = vadd.f32 0.0, %v829
        %v831 = vpop.f32.mrb[0].mxu0
        %832 = vdwg.mxu0
        %v833 = vld [vmem:[%s3] sm:$0x1]
        %v835 = vlaneseq
        %v836 = vshrl.u32 %v835, 7
        %v837 = vsub.s32 0, %v836
        %v838 = vrot.slane %v833, %v837
        %v840 = vmul.f32 %v830, %v838
        %v841 = vmax.f32 %v840, 0.0
        %v842 = vld [vmem:[%s4] sm:$0xff]
        %v843 = vld [vmem:[%s4 + $0x8] sm:$0xff]
        %v844 = vld [vmem:[%s4 + $0x10] sm:$0xff]
        %v845 = vld [vmem:[%s4 + $0x18] sm:$0xff]
        %v846 = vld [vmem:[%s4 + $0x20] sm:$0xff]
        %v847 = vld [vmem:[%s4 + $0x28] sm:$0xff]
        %v848 = vld [vmem:[%s4 + $0x30] sm:$0xff]
        %v849 = vld [vmem:[%s4 + $0x38] sm:$0xff]
        %v850 = vld [vmem:[%s4 + $0x40] sm:$0xff]
        %v851 = vld [vmem:[%s4 + $0x48] sm:$0xff]
        %v852 = vld [vmem:[%s4 + $0x50] sm:$0xff]
        %v853 = vld [vmem:[%s4 + $0x58] sm:$0xff]
        %v854 = vld [vmem:[%s4 + $0x60] sm:$0xff]
        %v855 = vld [vmem:[%s4 + $0x68] sm:$0xff]
        %v856 = vld [vmem:[%s4 + $0x70] sm:$0xff]
        %v857 = vld [vmem:[%s4 + $0x78] sm:$0xff]
        %v858 = vld [vmem:[%s4 + $0x80] sm:$0xff]
        %v859 = vld [vmem:[%s4 + $0x88] sm:$0xff]
        %v860 = vld [vmem:[%s4 + $0x90] sm:$0xff]
        %v861 = vld [vmem:[%s4 + $0x98] sm:$0xff]
        %v862 = vld [vmem:[%s4 + $0xa0] sm:$0xff]
        %v863 = vld [vmem:[%s4 + $0xa8] sm:$0xff]
        %v864 = vld [vmem:[%s4 + $0xb0] sm:$0xff]
        %v865 = vld [vmem:[%s4 + $0xb8] sm:$0xff]
        %v866 = vld [vmem:[%s4 + $0xc0] sm:$0xff]
        %v867 = vld [vmem:[%s4 + $0xc8] sm:$0xff]
        %v868 = vld [vmem:[%s4 + $0xd0] sm:$0xff]
        %v869 = vld [vmem:[%s4 + $0xd8] sm:$0xff]
        %v870 = vld [vmem:[%s4 + $0xe0] sm:$0xff]
        %v871 = vld [vmem:[%s4 + $0xe8] sm:$0xff]
        %v872 = vld [vmem:[%s4 + $0xf0] sm:$0xff]
        %v873 = vld [vmem:[%s4 + $0xf8] sm:$0xff]
        %v874 = vld [vmem:[%s4 + $0x100] sm:$0xff]
        %v875 = vld [vmem:[%s4 + $0x108] sm:$0xff]
        %v876 = vld [vmem:[%s4 + $0x110] sm:$0xff]
        %v877 = vld [vmem:[%s4 + $0x118] sm:$0xff]
        %v878 = vld [vmem:[%s4 + $0x120] sm:$0x3f]
        %v879 = vld [vmem:[%s4 + $0x128] sm:$0x3f]
        %v880 = vld [vmem:[%s5] sm:$0xff]
        %v881 = vld [vmem:[%s5 + $0x8] sm:$0xff]
        %v882 = vld [vmem:[%s5 + $0x10] sm:$0xff]
        %v883 = vld [vmem:[%s5 + $0x18] sm:$0xff]
        %v884 = vld [vmem:[%s5 + $0x20] sm:$0xff]
        %v885 = vld [vmem:[%s5 + $0x28] sm:$0xff]
        %v886 = vld [vmem:[%s5 + $0x30] sm:$0xff]
        %v887 = vld [vmem:[%s5 + $0x38] sm:$0xff]
        %v888 = vld [vmem:[%s5 + $0x40] sm:$0xff]
        %v889 = vld [vmem:[%s5 + $0x48] sm:$0xff]
        %v890 = vld [vmem:[%s5 + $0x50] sm:$0xff]
        %v891 = vld [vmem:[%s5 + $0x58] sm:$0xff]
        %v892 = vld [vmem:[%s5 + $0x60] sm:$0xff]
        %v893 = vld [vmem:[%s5 + $0x68] sm:$0xff]
        %v894 = vld [vmem:[%s5 + $0x70] sm:$0x7f]
        %v895 = vld [vmem:[%s5 + $0x78] sm:$0x7f]
        %vm896 = vcmask 515072
        %v898 = vsel %vm896, %v841, 0
        %vm900 = vcmask 1046528
        %v902 = vsel %vm900, %v894, 0
        %v905 = vsel %vm900, %v895, 0
        %907 = vmatprep.subr.mxu0 %v881
        %908 = vmatpush1.msra.mxu0 %v880
        %909 = vmatprep.subr.mxu0 %v883
        %910 = vmatpush1.msra.mxu0 %v882
        %911 = vmatprep.subr.mxu0 %v885
        %912 = vmatpush1.msra.mxu0 %v884
        %913 = vmatprep.subr.mxu0 %v887
        %914 = vmatpush1.msra.mxu0 %v886
        %915 = vmatprep.subr.mxu0 %v889
        %916 = vmatpush1.msra.mxu0 %v888
        %917 = vmatprep.subr.mxu0 %v891
        %918 = vmatpush1.msra.mxu0 %v890
        %919 = vmatprep.subr.mxu0 %v893
        %920 = vmatpush1.msra.mxu0 %v892
        %921 = vmatprep.subr.mxu0 %v905
        %922 = vmatpush1.msra.mxu0 %v902
        %923 = vmatprep.subr.mxu0 0.0
        %924 = vmatpush1.msra.mxu0 0.0
        %925 = vmatprep.subr.mxu0 0.0
        %926 = vmatpush1.msra.mxu0 0.0
        %927 = vmatprep.subr.mxu0 0.0
        %928 = vmatpush1.msra.mxu0 0.0
        %929 = vmatprep.subr.mxu0 0.0
        %930 = vmatpush1.msra.mxu0 0.0
        %931 = vmatprep.subr.mxu0 0.0
        %932 = vmatpush1.msra.mxu0 0.0
        %933 = vmatprep.subr.mxu0 0.0
        %934 = vmatpush1.msra.mxu0 0.0
        %935 = vmatprep.subr.mxu0 0.0
        %936 = vmatpush1.msra.mxu0 0.0
        %937 = vmatprep.subr.mxu0 0.0
        %938 = vmatpush1.msra.mxu0 0.0
        %939 = vmatprep.subr.mxu0 0.0
        %940 = vmatpush1.msra.mxu0 0.0
        %941 = vmatprep.subr.mxu0 0.0
        %942 = vmatpush1.msra.mxu0 0.0
        %943 = vmatprep.subr.mxu0 0.0
        %944 = vmatpush1.msra.mxu0 0.0
        %945 = vmatprep.subr.mxu0 0.0
        %946 = vmatpush1.msra.mxu0 0.0
        %947 = vmatprep.subr.mxu0 0.0
        %948 = vmatpush1.msra.mxu0 0.0
        %949 = vmatprep.subr.mxu0 0.0
        %950 = vmatpush1.msra.mxu0 0.0
        %951 = vmatprep.subr.mxu0 0.0
        %952 = vmatpush1.msra.mxu0 0.0
        %953 = vmatprep.subr.mxu0 0.0
        %954 = vmatpush1.msra.mxu0 0.0
        %955 = vmatprep.subr.mxu0 0.0
        %956 = vmatpush1.msra.mxu0 0.0
        %957 = vmatprep.subr.mxu0 0.0
        %958 = vmatpush1.msra.mxu0 0.0
        %959 = vmatprep.subr.mxu0 0.0
        %960 = vmatpush1.msra.mxu0 0.0
        %961 = vmatprep.subr.mxu0 0.0
        %962 = vmatpush1.msra.mxu0 0.0
        %963 = vmatprep.subr.mxu0 0.0
        %964 = vmatpush1.msra.mxu0 0.0
        %965 = vmatprep.subr.mxu0 0.0
        %966 = vmatpush1.msra.mxu0 0.0
        %967 = vmatprep.subr.mxu0 0.0
        %968 = vmatpush1.msra.mxu0 0.0
        %969 = vmatprep.subr.mxu0 0.0
        %970 = vmatpush1.msra.mxu0 0.0
        %971 = vmatprep.mubr.f32.mxu0 0.0
        %972 = vmatmul.mubr.f32.gmra.mrb[0].mxu0 %v898
        %v973 = vpop.f32.mrb[0].mxu0
        %v974 = vadd.f32 0.0, %v973
        %v975 = vpop.f32.mrb[0].mxu0
        %v976 = vadd.f32 0.0, %v975
        %977 = vdwg.mxu0
        %v979 = vsel %vm759, %v878, 0
        %v982 = vsel %vm759, %v879, 0
        %984 = vmatprep.subr.mxu0 %v843
        %985 = vmatpush1.msra.mxu0 %v842
        %986 = vmatprep.subr.mxu0 %v845
        %987 = vmatpush1.msra.mxu0 %v844
        %988 = vmatprep.subr.mxu0 %v847
        %989 = vmatpush1.msra.mxu0 %v846
        %990 = vmatprep.subr.mxu0 %v849
        %991 = vmatpush1.msra.mxu0 %v848
        %992 = vmatprep.subr.mxu0 %v851
        %993 = vmatpush1.msra.mxu0 %v850
        %994 = vmatprep.subr.mxu0 %v853
        %995 = vmatpush1.msra.mxu0 %v852
        %996 = vmatprep.subr.mxu0 %v855
        %997 = vmatpush1.msra.mxu0 %v854
        %998 = vmatprep.subr.mxu0 %v857
        %999 = vmatpush1.msra.mxu0 %v856
        %1000 = vmatprep.subr.mxu0 %v859
        %1001 = vmatpush1.msra.mxu0 %v858
        %1002 = vmatprep.subr.mxu0 %v861
        %1003 = vmatpush1.msra.mxu0 %v860
        %1004 = vmatprep.subr.mxu0 %v863
        %1005 = vmatpush1.msra.mxu0 %v862
        %1006 = vmatprep.subr.mxu0 %v865
        %1007 = vmatpush1.msra.mxu0 %v864
        %1008 = vmatprep.subr.mxu0 %v867
        %1009 = vmatpush1.msra.mxu0 %v866
        %1010 = vmatprep.subr.mxu0 %v869
        %1011 = vmatpush1.msra.mxu0 %v868
        %1012 = vmatprep.subr.mxu0 %v871
        %1013 = vmatpush1.msra.mxu0 %v870
        %1014 = vmatprep.subr.mxu0 %v873
        %1015 = vmatpush1.msra.mxu0 %v872
        %1016 = vmatprep.subr.mxu0 %v875
        %1017 = vmatpush1.msra.mxu0 %v874
        %1018 = vmatprep.subr.mxu0 %v877
        %1019 = vmatpush1.msra.mxu0 %v876
        %1020 = vmatprep.subr.mxu0 %v982
        %1021 = vmatpush1.msra.mxu0 %v979
        %1022 = vmatprep.subr.mxu0 0.0
        %1023 = vmatpush1.msra.mxu0 0.0
        %1024 = vmatprep.subr.mxu0 0.0
        %1025 = vmatpush1.msra.mxu0 0.0
        %1026 = vmatprep.subr.mxu0 0.0
        %1027 = vmatpush1.msra.mxu0 0.0
        %1028 = vmatprep.subr.mxu0 0.0
        %1029 = vmatpush1.msra.mxu0 0.0
        %1030 = vmatprep.subr.mxu0 0.0
        %1031 = vmatpush1.msra.mxu0 0.0
        %1032 = vmatprep.subr.mxu0 0.0
        %1033 = vmatpush1.msra.mxu0 0.0
        %1034 = vmatprep.subr.mxu0 0.0
        %1035 = vmatpush1.msra.mxu0 0.0
        %1036 = vmatprep.subr.mxu0 0.0
        %1037 = vmatpush1.msra.mxu0 0.0
        %1038 = vmatprep.subr.mxu0 0.0
        %1039 = vmatpush1.msra.mxu0 0.0
        %1040 = vmatprep.subr.mxu0 0.0
        %1041 = vmatpush1.msra.mxu0 0.0
        %1042 = vmatprep.subr.mxu0 0.0
        %1043 = vmatpush1.msra.mxu0 0.0
        %1044 = vmatprep.subr.mxu0 0.0
        %1045 = vmatpush1.msra.mxu0 0.0
        %1046 = vmatprep.subr.mxu0 0.0
        %1047 = vmatpush1.msra.mxu0 0.0
        %1048 = vmatprep.mubr.f32.mxu0 %v757
        %1049 = vmatmul.mubr.f32.gmra.mrb[0].mxu0 %v734
        %v1050 = vpop.f32.mrb[0].mxu0
        %v1051 = vadd.f32 %v974, %v1050
        %v1052 = vpop.f32.mrb[0].mxu0
        %v1053 = vadd.f32 %v976, %v1052
        %1054 = vdwg.mxu0
        %v1055 = vld [vmem:[%s6] sm:$0x3]
        %v1057 = vlaneseq
        %v1058 = vshrl.u32 %v1057, 7
        %v1059 = vsub.s32 0, %v1058
        %v1060 = vrot.slane %v1055, %v1059
        %v1061 = vlaneseq
        %v1062 = vshrl.u32 %v1061, 7
        %v1063 = vsub.s32 1, %v1062
        %v1064 = vrot.slane %v1055, %v1063
        %v1067 = vadd.f32 %v1051, %v1060
        %v1068 = vadd.f32 %v1053, %v1064
        %v1069 = vmax.f32 %v1067, 0.0
        %v1070 = vmax.f32 %v1068, 0.0
        %v1071 = vmul.f32 %v1069, %v1069
        %v1072 = vmul.f32 %v1070, %v1070
        %v1073 = vlaneseq
        %v1074 = vand.u32 %v1073, 127
        %v1075 = vadd.s32 %v1074, 128
        %vm1076 = vcmp.ge.s32.totalorder %v1074, 1
        %vm1077 = vcmp.ge.s32.totalorder %v1075, 1
        %1078 = vrot.lane.b32.xlu0 %v1071, 1
        %v1079 = vpop.permute.xlu0 %1078
        %1080 = vrot.lane.b32.xlu0 %v1072, 1
        %v1081 = vpop.permute.xlu0 %1080
        %vm1082 = vcmp.lt.s32.totalorder %v1074, 1
        %v1083 = vsel %vm1082, %v1079, %v1081
        %v1084 = vsel %vm1082, %v1081, %v1079
        %v1085 = vsel %vm1076, %v1084, 0.0
        %v1086 = vsel %vm1077, %v1083, 0.0
        %v1087 = vadd.f32 %v1071, %v1085
        %v1088 = vadd.f32 %v1072, %v1086
        %vm1089 = vcmp.ge.s32.totalorder %v1074, 2
        %vm1090 = vcmp.ge.s32.totalorder %v1075, 2
        %1091 = vrot.lane.b32.xlu0 %v1071, 2
        %v1092 = vpop.permute.xlu0 %1091
        %1093 = vrot.lane.b32.xlu0 %v1072, 2
        %v1094 = vpop.permute.xlu0 %1093
        %vm1095 = vcmp.lt.s32.totalorder %v1074, 2
        %v1096 = vsel %vm1095, %v1092, %v1094
        %v1097 = vsel %vm1095, %v1094, %v1092
        %v1098 = vsel %vm1089, %v1097, 0.0
        %v1099 = vsel %vm1090, %v1096, 0.0
        %v1100 = vadd.f32 %v1087, %v1098
        %v1101 = vadd.f32 %v1088, %v1099
        %vm1102 = vcmp.lt.s32.totalorder %v1074, 255
        %vm1103 = vcmp.lt.s32.totalorder %v1075, 255
        %1104 = vrot.lane.b32.xlu0 %v1071, 127
        %v1105 = vpop.permute.xlu0 %1104
        %1106 = vrot.lane.b32.xlu0 %v1072, 127
        %v1107 = vpop.permute.xlu0 %1106
        %vm1108 = vcmp.lt.s32.totalorder %v1074, 127
        %v1109 = vsel %vm1108, %v1105, %v1107
        %v1110 = vsel %vm1108, %v1107, %v1105
        %v1111 = vsel %vm1102, %v1109, 0.0
        %v1112 = vsel %vm1103, %v1110, 0.0
        %v1113 = vadd.f32 %v1100, %v1111
        %v1114 = vadd.f32 %v1101, %v1112
        %v1115 = vmul.f32 %v1113, 0.25
        %v1116 = vmul.f32 %v1114, 0.25
        %v1117 = vmul.f32 %v1115, 0.0001
        %v1118 = vmul.f32 %v1116, 0.0001
        %v1119 = vadd.f32 %v1117, 2.0
        %v1120 = vadd.f32 %v1118, 2.0
        %v1121 = vlog2.pop %v1119
        %v1122 = vmul.f32 %v1121, 0.6931472
        %v1123 = vlog2.pop %v1120
        %v1124 = vmul.f32 %v1123, 0.6931472
        %v1125 = vmul.f32 %v1122, -0.75
        %v1126 = vmul.f32 %v1124, -0.75
        %v1127 = vmul.f32 %v1125, 1.442695
        %v1128 = vpow.pop %v1127
        %v1129 = vmul.f32 %v1126, 1.442695
        %v1130 = vpow.pop %v1129
        %v1131 = vmul.f32 %v1069, %v1128
        %v1132 = vmul.f32 %v1070, %v1130
        %v1133 = vld [vmem:[#allocation7] sm:$0xff]
        %v1134 = vld [vmem:[#allocation7 + $0x8] sm:$0xff]
        %v1135 = vld [vmem:[#allocation7 + $0x10] sm:$0xff]
        %v1136 = vld [vmem:[#allocation7 + $0x18] sm:$0xff]
        %v1137 = vld [vmem:[#allocation7 + $0x20] sm:$0xff]
        %v1138 = vld [vmem:[#allocation7 + $0x28] sm:$0xff]
        %v1139 = vld [vmem:[#allocation7 + $0x30] sm:$0xff]
        %v1140 = vld [vmem:[#allocation7 + $0x38] sm:$0xff]
        %v1141 = vld [vmem:[#allocation7 + $0x40] sm:$0xff]
        %v1142 = vld [vmem:[#allocation7 + $0x48] sm:$0xff]
        %v1143 = vld [vmem:[#allocation7 + $0x50] sm:$0xff]
        %v1144 = vld [vmem:[#allocation7 + $0x58] sm:$0xff]
        %v1145 = vld [vmem:[#allocation7 + $0x60] sm:$0xff]
        %v1146 = vld [vmem:[#allocation7 + $0x68] sm:$0xff]
        %v1147 = vld [vmem:[#allocation7 + $0x70] sm:$0xff]
        %v1148 = vld [vmem:[#allocation7 + $0x78] sm:$0xff]
        %v1149 = vld [vmem:[#allocation7 + $0x80] sm:$0xff]
        %v1150 = vld [vmem:[#allocation7 + $0x88] sm:$0xff]
        %v1151 = vld [vmem:[#allocation7 + $0x90] sm:$0xff]
        %v1152 = vld [vmem:[#allocation7 + $0x98] sm:$0xff]
        %v1153 = vld [vmem:[#allocation7 + $0xa0] sm:$0xff]
        %v1154 = vld [vmem:[#allocation7 + $0xa8] sm:$0xff]
        %v1155 = vld [vmem:[#allocation7 + $0xb0] sm:$0xff]
        %v1156 = vld [vmem:[#allocation7 + $0xb8] sm:$0xff]
        %v1157 = vld [vmem:[#allocation7 + $0xc0] sm:$0xff]
        %v1158 = vld [vmem:[#allocation7 + $0xc8] sm:$0xff]
        %v1159 = vld [vmem:[#allocation7 + $0xd0] sm:$0xff]
        %v1160 = vld [vmem:[#allocation7 + $0xd8] sm:$0xff]
        %v1161 = vld [vmem:[#allocation7 + $0xe0] sm:$0xff]
        %v1162 = vld [vmem:[#allocation7 + $0xe8] sm:$0xff]
        %v1163 = vld [vmem:[#allocation7 + $0xf0] sm:$0xff]
        %v1164 = vld [vmem:[#allocation7 + $0xf8] sm:$0xff]
        %v1165 = vld [vmem:[%s8] sm:$0x1]
        %v1167 = vlaneseq
        %v1168 = vshrl.u32 %v1167, 7
        %v1169 = vsub.s32 0, %v1168
        %v1170 = vrot.slane %v1165, %v1169
        %1172 = vmatprep.subr.mxu0 0.0
        %1173 = vmatpush1.msra.mxu0 %v1133
        %1174 = vmatprep.subr.mxu0 0.0
        %1175 = vmatpush1.msra.mxu0 %v1134
        %1176 = vmatprep.subr.mxu0 0.0
        %1177 = vmatpush1.msra.mxu0 %v1135
        %1178 = vmatprep.subr.mxu0 0.0
        %1179 = vmatpush1.msra.mxu0 %v1136
        %1180 = vmatprep.subr.mxu0 0.0
        %1181 = vmatpush1.msra.mxu0 %v1137
        %1182 = vmatprep.subr.mxu0 0.0
        %1183 = vmatpush1.msra.mxu0 %v1138
        %1184 = vmatprep.subr.mxu0 0.0
        %1185 = vmatpush1.msra.mxu0 %v1139
        %1186 = vmatprep.subr.mxu0 0.0
        %1187 = vmatpush1.msra.mxu0 %v1140
        %1188 = vmatprep.subr.mxu0 0.0
        %1189 = vmatpush1.msra.mxu0 %v1141
        %1190 = vmatprep.subr.mxu0 0.0
        %1191 = vmatpush1.msra.mxu0 %v1142
        %1192 = vmatprep.subr.mxu0 0.0
        %1193 = vmatpush1.msra.mxu0 %v1143
        %1194 = vmatprep.subr.mxu0 0.0
        %1195 = vmatpush1.msra.mxu0 %v1144
        %1196 = vmatprep.subr.mxu0 0.0
        %1197 = vmatpush1.msra.mxu0 %v1145
        %1198 = vmatprep.subr.mxu0 0.0
        %1199 = vmatpush1.msra.mxu0 %v1146
        %1200 = vmatprep.subr.mxu0 0.0
        %1201 = vmatpush1.msra.mxu0 %v1147
        %1202 = vmatprep.subr.mxu0 0.0
        %1203 = vmatpush1.msra.mxu0 %v1148
        %1204 = vmatprep.subr.mxu0 0.0
        %1205 = vmatpush1.msra.mxu0 %v1149
        %1206 = vmatprep.subr.mxu0 0.0
        %1207 = vmatpush1.msra.mxu0 %v1150
        %1208 = vmatprep.subr.mxu0 0.0
        %1209 = vmatpush1.msra.mxu0 %v1151
        %1210 = vmatprep.subr.mxu0 0.0
        %1211 = vmatpush1.msra.mxu0 %v1152
        %1212 = vmatprep.subr.mxu0 0.0
        %1213 = vmatpush1.msra.mxu0 %v1153
        %1214 = vmatprep.subr.mxu0 0.0
        %1215 = vmatpush1.msra.mxu0 %v1154
        %1216 = vmatprep.subr.mxu0 0.0
        %1217 = vmatpush1.msra.mxu0 %v1155
        %1218 = vmatprep.subr.mxu0 0.0
        %1219 = vmatpush1.msra.mxu0 %v1156
        %1220 = vmatprep.subr.mxu0 0.0
        %1221 = vmatpush1.msra.mxu0 %v1157
        %1222 = vmatprep.subr.mxu0 0.0
        %1223 = vmatpush1.msra.mxu0 %v1158
        %1224 = vmatprep.subr.mxu0 0.0
        %1225 = vmatpush1.msra.mxu0 %v1159
        %1226 = vmatprep.subr.mxu0 0.0
        %1227 = vmatpush1.msra.mxu0 %v1160
        %1228 = vmatprep.subr.mxu0 0.0
        %1229 = vmatpush1.msra.mxu0 %v1161
        %1230 = vmatprep.subr.mxu0 0.0
        %1231 = vmatpush1.msra.mxu0 %v1162
        %1232 = vmatprep.subr.mxu0 0.0
        %1233 = vmatpush1.msra.mxu0 %v1163
        %1234 = vmatprep.subr.mxu0 0.0
        %1235 = vmatpush1.msra.mxu0 %v1164
        %1236 = vmatprep.mubr.f32.mxu0 %v1132
        %1237 = vmatmul.mubr.f32.gmra.mrb[0].mxu0 %v1131
        %v1238 = vpop.f32.mrb[0].mxu0
        %v1239 = vadd.f32 %v1170, %v1238
        %v1240 = vpop.f32.mrb[0].mxu0
        %1241 = vdwg.mxu0
        %v1242 = vmax.f32 %v1239, 0.0
        %v1243 = vld [vmem:[#allocation8] sm:$0xff]
        %v1244 = vld [vmem:[#allocation8 + $0x8] sm:$0xff]
        %v1245 = vld [vmem:[#allocation8 + $0x10] sm:$0xff]
        %v1246 = vld [vmem:[#allocation8 + $0x18] sm:$0xff]
        %v1247 = vld [vmem:[#allocation8 + $0x20] sm:$0xff]
        %v1248 = vld [vmem:[#allocation8 + $0x28] sm:$0xff]
        %v1249 = vld [vmem:[#allocation8 + $0x30] sm:$0xff]
        %v1250 = vld [vmem:[#allocation8 + $0x38] sm:$0xff]
        %v1251 = vld [vmem:[#allocation8 + $0x40] sm:$0xff]
        %v1252 = vld [vmem:[#allocation8 + $0x48] sm:$0xff]
        %v1253 = vld [vmem:[#allocation8 + $0x50] sm:$0xff]
        %v1254 = vld [vmem:[#allocation8 + $0x58] sm:$0xff]
        %v1255 = vld [vmem:[#allocation8 + $0x60] sm:$0xff]
        %v1256 = vld [vmem:[#allocation8 + $0x68] sm:$0xff]
        %v1257 = vld [vmem:[#allocation8 + $0x70] sm:$0xff]
        %v1258 = vld [vmem:[#allocation8 + $0x78] sm:$0xff]
        %v1259 = vld [vmem:[#allocation8 + $0x80] sm:$0xff]
        %v1260 = vld [vmem:[#allocation8 + $0x88] sm:$0xff]
        %v1261 = vld [vmem:[#allocation8 + $0x90] sm:$0xff]
        %v1262 = vld [vmem:[#allocation8 + $0x98] sm:$0xff]
        %v1263 = vld [vmem:[#allocation8 + $0xa0] sm:$0xff]
        %v1264 = vld [vmem:[#allocation8 + $0xa8] sm:$0xff]
        %v1265 = vld [vmem:[#allocation8 + $0xb0] sm:$0xff]
        %v1266 = vld [vmem:[#allocation8 + $0xb8] sm:$0xff]
        %v1267 = vld [vmem:[#allocation8 + $0xc0] sm:$0xff]
        %v1268 = vld [vmem:[#allocation8 + $0xc8] sm:$0xff]
        %v1269 = vld [vmem:[#allocation8 + $0xd0] sm:$0xff]
        %v1270 = vld [vmem:[#allocation8 + $0xd8] sm:$0xff]
        %v1271 = vld [vmem:[#allocation8 + $0xe0] sm:$0xff]
        %v1272 = vld [vmem:[#allocation8 + $0xe8] sm:$0xff]
        %v1273 = vld [vmem:[#allocation8 + $0xf0] sm:$0xff]
        %v1274 = vld [vmem:[#allocation8 + $0xf8] sm:$0xff]
        %v1275 = vld [vmem:[%s10] sm:$0x1]
        %v1277 = vlaneseq
        %v1278 = vshrl.u32 %v1277, 7
        %v1279 = vsub.s32 0, %v1278
        %v1280 = vrot.slane %v1275, %v1279
        %1282 = vmatprep.subr.mxu0 0.0
        %1283 = vmatpush1.msra.mxu0 %v1243
        %1284 = vmatprep.subr.mxu0 0.0
        %1285 = vmatpush1.msra.mxu0 %v1244
        %1286 = vmatprep.subr.mxu0 0.0
        %1287 = vmatpush1.msra.mxu0 %v1245
        %1288 = vmatprep.subr.mxu0 0.0
        %1289 = vmatpush1.msra.mxu0 %v1246
        %1290 = vmatprep.subr.mxu0 0.0
        %1291 = vmatpush1.msra.mxu0 %v1247
        %1292 = vmatprep.subr.mxu0 0.0
        %1293 = vmatpush1.msra.mxu0 %v1248
        %1294 = vmatprep.subr.mxu0 0.0
        %1295 = vmatpush1.msra.mxu0 %v1249
        %1296 = vmatprep.subr.mxu0 0.0
        %1297 = vmatpush1.msra.mxu0 %v1250
        %1298 = vmatprep.subr.mxu0 0.0
        %1299 = vmatpush1.msra.mxu0 %v1251
        %1300 = vmatprep.subr.mxu0 0.0
        %1301 = vmatpush1.msra.mxu0 %v1252
        %1302 = vmatprep.subr.mxu0 0.0
        %1303 = vmatpush1.msra.mxu0 %v1253
        %1304 = vmatprep.subr.mxu0 0.0
        %1305 = vmatpush1.msra.mxu0 %v1254
        %1306 = vmatprep.subr.mxu0 0.0
        %1307 = vmatpush1.msra.mxu0 %v1255
        %1308 = vmatprep.subr.mxu0 0.0
        %1309 = vmatpush1.msra.mxu0 %v1256
        %1310 = vmatprep.subr.mxu0 0.0
        %1311 = vmatpush1.msra.mxu0 %v1257
        %1312 = vmatprep.subr.mxu0 0.0
        %1313 = vmatpush1.msra.mxu0 %v1258
        %1314 = vmatprep.subr.mxu0 0.0
        %1315 = vmatpush1.msra.mxu0 %v1259
        %1316 = vmatprep.subr.mxu0 0.0
        %1317 = vmatpush1.msra.mxu0 %v1260
        %1318 = vmatprep.subr.mxu0 0.0
        %1319 = vmatpush1.msra.mxu0 %v1261
        %1320 = vmatprep.subr.mxu0 0.0
        %1321 = vmatpush1.msra.mxu0 %v1262
        %1322 = vmatprep.subr.mxu0 0.0
        %1323 = vmatpush1.msra.mxu0 %v1263
        %1324 = vmatprep.subr.mxu0 0.0
        %1325 = vmatpush1.msra.mxu0 %v1264
        %1326 = vmatprep.subr.mxu0 0.0
        %1327 = vmatpush1.msra.mxu0 %v1265
        %1328 = vmatprep.subr.mxu0 0.0
        %1329 = vmatpush1.msra.mxu0 %v1266
        %1330 = vmatprep.subr.mxu0 0.0
        %1331 = vmatpush1.msra.mxu0 %v1267
        %1332 = vmatprep.subr.mxu0 0.0
        %1333 = vmatpush1.msra.mxu0 %v1268
        %1334 = vmatprep.subr.mxu0 0.0
        %1335 = vmatpush1.msra.mxu0 %v1269
        %1336 = vmatprep.subr.mxu0 0.0
        %1337 = vmatpush1.msra.mxu0 %v1270
        %1338 = vmatprep.subr.mxu0 0.0
        %1339 = vmatpush1.msra.mxu0 %v1271
        %1340 = vmatprep.subr.mxu0 0.0
        %1341 = vmatpush1.msra.mxu0 %v1272
        %1342 = vmatprep.subr.mxu0 0.0
        %1343 = vmatpush1.msra.mxu0 %v1273
        %1344 = vmatprep.subr.mxu0 0.0
        %1345 = vmatpush1.msra.mxu0 %v1274
        %1346 = vmatprep.mubr.f32.mxu0 %v1132
        %1347 = vmatmul.mubr.f32.gmra.mrb[0].mxu0 %v1131
        %v1348 = vpop.f32.mrb[0].mxu0
        %v1349 = vadd.f32 %v1280, %v1348
        %v1350 = vpop.f32.mrb[0].mxu0
        %1351 = vdwg.mxu0
        %v1352 = vmax.f32 %v1349, 0.0
        %v1353 = vld [vmem:[%s642] sm:$0xff]
        %v1354 = vmul.f32 %v1352, 0.5
        %v1355 = vmul.f32 %v1354, 1.442695
        %v1356 = vpow.pop %v1355
        %v1357 = vmul.f32 %v1353, %v1356
        %v1358 = vadd.f32 %v1357, %v1242
        %v1359 = vmax.f32 %v1358, 0.0
        %v1360 = vld [vmem:[#allocation10] sm:$0xff]
        %v1361 = vld [vmem:[#allocation10 + $0x8] sm:$0xff]
        %v1362 = vld [vmem:[#allocation10 + $0x10] sm:$0xff]
        %v1363 = vld [vmem:[#allocation10 + $0x18] sm:$0xff]
        %v1364 = vld [vmem:[#allocation10 + $0x20] sm:$0xff]
        %v1365 = vld [vmem:[#allocation10 + $0x28] sm:$0xff]
        %v1366 = vld [vmem:[#allocation10 + $0x30] sm:$0xff]
        %v1367 = vld [vmem:[#allocation10 + $0x38] sm:$0xff]
        %v1368 = vld [vmem:[#allocation10 + $0x40] sm:$0xff]
        %v1369 = vld [vmem:[#allocation10 + $0x48] sm:$0xff]
        %v1370 = vld [vmem:[#allocation10 + $0x50] sm:$0xff]
        %v1371 = vld [vmem:[#allocation10 + $0x58] sm:$0xff]
        %v1372 = vld [vmem:[#allocation10 + $0x60] sm:$0xff]
        %v1373 = vld [vmem:[#allocation10 + $0x68] sm:$0xff]
        %v1374 = vld [vmem:[#allocation10 + $0x70] sm:$0xff]
        %v1375 = vld [vmem:[#allocation10 + $0x78] sm:$0xff]
        %v1376 = vld [vmem:[%s12] sm:$0x1]
        %v1378 = vlaneseq
        %v1379 = vshrl.u32 %v1378, 7
        %v1380 = vsub.s32 0, %v1379
        %v1381 = vrot.slane %v1376, %v1380
        %1383 = vmatprep.subr.mxu0 0.0
        %1384 = vmatpush1.msra.mxu0 %v1360
        %1385 = vmatprep.subr.mxu0 0.0
        %1386 = vmatpush1.msra.mxu0 %v1361
        %1387 = vmatprep.subr.mxu0 0.0
        %1388 = vmatpush1.msra.mxu0 %v1362
        %1389 = vmatprep.subr.mxu0 0.0
        %1390 = vmatpush1.msra.mxu0 %v1363
        %1391 = vmatprep.subr.mxu0 0.0
        %1392 = vmatpush1.msra.mxu0 %v1364
        %1393 = vmatprep.subr.mxu0 0.0
        %1394 = vmatpush1.msra.mxu0 %v1365
        %1395 = vmatprep.subr.mxu0 0.0
        %1396 = vmatpush1.msra.mxu0 %v1366
        %1397 = vmatprep.subr.mxu0 0.0
        %1398 = vmatpush1.msra.mxu0 %v1367
        %1399 = vmatprep.subr.mxu0 0.0
        %1400 = vmatpush1.msra.mxu0 %v1368
        %1401 = vmatprep.subr.mxu0 0.0
        %1402 = vmatpush1.msra.mxu0 %v1369
        %1403 = vmatprep.subr.mxu0 0.0
        %1404 = vmatpush1.msra.mxu0 %v1370
        %1405 = vmatprep.subr.mxu0 0.0
        %1406 = vmatpush1.msra.mxu0 %v1371
        %1407 = vmatprep.subr.mxu0 0.0
        %1408 = vmatpush1.msra.mxu0 %v1372
        %1409 = vmatprep.subr.mxu0 0.0
        %1410 = vmatpush1.msra.mxu0 %v1373
        %1411 = vmatprep.subr.mxu0 0.0
        %1412 = vmatpush1.msra.mxu0 %v1374
        %1413 = vmatprep.subr.mxu0 0.0
        %1414 = vmatpush1.msra.mxu0 %v1375
        %1415 = vmatprep.subr.mxu0 0.0
        %1416 = vmatpush1.msra.mxu0 0.0
        %1417 = vmatprep.subr.mxu0 0.0
        %1418 = vmatpush1.msra.mxu0 0.0
        %1419 = vmatprep.subr.mxu0 0.0
        %1420 = vmatpush1.msra.mxu0 0.0
        %1421 = vmatprep.subr.mxu0 0.0
        %1422 = vmatpush1.msra.mxu0 0.0
        %1423 = vmatprep.subr.mxu0 0.0
        %1424 = vmatpush1.msra.mxu0 0.0
        %1425 = vmatprep.subr.mxu0 0.0
        %1426 = vmatpush1.msra.mxu0 0.0
        %1427 = vmatprep.subr.mxu0 0.0
        %1428 = vmatpush1.msra.mxu0 0.0
        %1429 = vmatprep.subr.mxu0 0.0
        %1430 = vmatpush1.msra.mxu0 0.0
        %1431 = vmatprep.subr.mxu0 0.0
        %1432 = vmatpush1.msra.mxu0 0.0
        %1433 = vmatprep.subr.mxu0 0.0
        %1434 = vmatpush1.msra.mxu0 0.0
        %1435 = vmatprep.subr.mxu0 0.0
        %1436 = vmatpush1.msra.mxu0 0.0
        %1437 = vmatprep.subr.mxu0 0.0
        %1438 = vmatpush1.msra.mxu0 0.0
        %1439 = vmatprep.subr.mxu0 0.0
        %1440 = vmatpush1.msra.mxu0 0.0
        %1441 = vmatprep.subr.mxu0 0.0
        %1442 = vmatpush1.msra.mxu0 0.0
        %1443 = vmatprep.subr.mxu0 0.0
        %1444 = vmatpush1.msra.mxu0 0.0
        %1445 = vmatprep.subr.mxu0 0.0
        %1446 = vmatpush1.msra.mxu0 0.0
        %1447 = vmatprep.mubr.f32.mxu0 0.0
        %1448 = vmatmul.mubr.f32.gmra.mrb[0].mxu0 %v1359
        %v1449 = vpop.f32.mrb[0].mxu0
        %v1450 = vadd.f32 %v1381, %v1449
        %v1451 = vpop.f32.mrb[0].mxu0
        %1452 = vdwg.mxu0
        %v1453 = vmul.f32 %v1359, %v1359
        %1454 = vrot.lane.b32.xlu0 %v1453, 1
        %v1455 = vpop.permute.xlu0 %1454
        %v1456 = vsel %vm1076, %v1455, 0.0
        %v1457 = vadd.f32 %v1453, %v1456
        %1458 = vrot.lane.b32.xlu0 %v1453, 2
        %v1459 = vpop.permute.xlu0 %1458
        %v1460 = vsel %vm1089, %v1459, 0.0
        %v1461 = vadd.f32 %v1457, %v1460
        %1462 = vrot.lane.b32.xlu0 %v1453, 127
        %v1463 = vpop.permute.xlu0 %1462
        %v1464 = vsel %vm1108, %v1463, 0.0
        %v1465 = vadd.f32 %v1461, %v1464
        %v1466 = vmul.f32 %v1465, 0.25
        %v1467 = vmul.f32 %v1466, 0.0001
        %v1468 = vadd.f32 %v1467, 2.0
        %v1469 = vlog2.pop %v1468
        %v1470 = vmul.f32 %v1469, 0.6931472
        %v1471 = vmul.f32 %v1470, -0.75
        %v1472 = vmul.f32 %v1471, 1.442695
        %v1473 = vpow.pop %v1472
        %v1474 = vmul.f32 %v1359, %v1473
        %v1475 = vld [vmem:[%s13] sm:$0xff]
        %v1476 = vld [vmem:[%s13 + $0x8] sm:$0xff]
        %v1477 = vld [vmem:[%s13 + $0x10] sm:$0xff]
        %v1478 = vld [vmem:[%s13 + $0x18] sm:$0xff]
        %v1479 = vld [vmem:[%s13 + $0x20] sm:$0xff]
        %v1480 = vld [vmem:[%s13 + $0x28] sm:$0xff]
        %v1481 = vld [vmem:[%s13 + $0x30] sm:$0xff]
        %v1482 = vld [vmem:[%s13 + $0x38] sm:$0xff]
        %v1483 = vld [vmem:[%s13 + $0x40] sm:$0xff]
        %v1484 = vld [vmem:[%s13 + $0x48] sm:$0xff]
        %v1485 = vld [vmem:[%s13 + $0x50] sm:$0xff]
        %v1486 = vld [vmem:[%s13 + $0x58] sm:$0xff]
        %v1487 = vld [vmem:[%s13 + $0x60] sm:$0xff]
        %v1488 = vld [vmem:[%s13 + $0x68] sm:$0xff]
        %v1489 = vld [vmem:[%s13 + $0x70] sm:$0xff]
        %v1490 = vld [vmem:[%s13 + $0x78] sm:$0xff]
        %v1491 = vld [vmem:[%s14] sm:$0x1]
        %v1493 = vlaneseq
        %v1494 = vshrl.u32 %v1493, 7
        %v1495 = vsub.s32 0, %v1494
        %v1496 = vrot.slane %v1491, %v1495
        %1498 = vmatprep.subr.mxu0 0.0
        %1499 = vmatpush1.msra.mxu0 %v1475
        %1500 = vmatprep.subr.mxu0 0.0
        %1501 = vmatpush1.msra.mxu0 %v1476
        %1502 = vmatprep.subr.mxu0 0.0
        %1503 = vmatpush1.msra.mxu0 %v1477
        %1504 = vmatprep.subr.mxu0 0.0
        %1505 = vmatpush1.msra.mxu0 %v1478
        %1506 = vmatprep.subr.mxu0 0.0
        %1507 = vmatpush1.msra.mxu0 %v1479
        %1508 = vmatprep.subr.mxu0 0.0
        %1509 = vmatpush1.msra.mxu0 %v1480
        %1510 = vmatprep.subr.mxu0 0.0
        %1511 = vmatpush1.msra.mxu0 %v1481
        %1512 = vmatprep.subr.mxu0 0.0
        %1513 = vmatpush1.msra.mxu0 %v1482
        %1514 = vmatprep.subr.mxu0 0.0
        %1515 = vmatpush1.msra.mxu0 %v1483
        %1516 = vmatprep.subr.mxu0 0.0
        %1517 = vmatpush1.msra.mxu0 %v1484
        %1518 = vmatprep.subr.mxu0 0.0
        %1519 = vmatpush1.msra.mxu0 %v1485
        %1520 = vmatprep.subr.mxu0 0.0
        %1521 = vmatpush1.msra.mxu0 %v1486
        %1522 = vmatprep.subr.mxu0 0.0
        %1523 = vmatpush1.msra.mxu0 %v1487
        %1524 = vmatprep.subr.mxu0 0.0
        %1525 = vmatpush1.msra.mxu0 %v1488
        %1526 = vmatprep.subr.mxu0 0.0
        %1527 = vmatpush1.msra.mxu0 %v1489
        %1528 = vmatprep.subr.mxu0 0.0
        %1529 = vmatpush1.msra.mxu0 %v1490
        %1530 = vmatprep.subr.mxu0 0.0
        %1531 = vmatpush1.msra.mxu0 0.0
        %1532 = vmatprep.subr.mxu0 0.0
        %1533 = vmatpush1.msra.mxu0 0.0
        %1534 = vmatprep.subr.mxu0 0.0
        %1535 = vmatpush1.msra.mxu0 0.0
        %1536 = vmatprep.subr.mxu0 0.0
        %1537 = vmatpush1.msra.mxu0 0.0
        %1538 = vmatprep.subr.mxu0 0.0
        %1539 = vmatpush1.msra.mxu0 0.0
        %1540 = vmatprep.subr.mxu0 0.0
        %1541 = vmatpush1.msra.mxu0 0.0
        %1542 = vmatprep.subr.mxu0 0.0
        %1543 = vmatpush1.msra.mxu0 0.0
        %1544 = vmatprep.subr.mxu0 0.0
        %1545 = vmatpush1.msra.mxu0 0.0
        %1546 = vmatprep.subr.mxu0 0.0
        %1547 = vmatpush1.msra.mxu0 0.0
        %1548 = vmatprep.subr.mxu0 0.0
        %1549 = vmatpush1.msra.mxu0 0.0
        %1550 = vmatprep.subr.mxu0 0.0
        %1551 = vmatpush1.msra.mxu0 0.0
        %1552 = vmatprep.subr.mxu0 0.0
        %1553 = vmatpush1.msra.mxu0 0.0
        %1554 = vmatprep.subr.mxu0 0.0
        %1555 = vmatpush1.msra.mxu0 0.0
        %1556 = vmatprep.subr.mxu0 0.0
        %1557 = vmatpush1.msra.mxu0 0.0
        %1558 = vmatprep.subr.mxu0 0.0
        %1559 = vmatpush1.msra.mxu0 0.0
        %1560 = vmatprep.subr.mxu0 0.0
        %1561 = vmatpush1.msra.mxu0 0.0
        %1562 = vmatprep.mubr.f32.mxu0 0.0
        %1563 = vmatmul.mubr.f32.gmra.mrb[0].mxu0 %v1474
        %v1564 = vpop.f32.mrb[0].mxu0
        %v1565 = vadd.f32 %v1496, %v1564
        %v1566 = vpop.f32.mrb[0].mxu0
        %1567 = vdwg.mxu0
        %vm1568 = vcmp.lt.s32.totalorder %v1074, 16
        %v1569 = vtanh.pop %v1565
        %v1570 = vsub.f32 0.0, %v1565
        %v1571 = vmul.f32 %v1570, 1.442695
        %v1572 = vpow.pop %v1571
        %v1573 = vadd.f32 %v1572, 1.0
        %v1574 = vrcp.pop %v1573
        %v1575 = vmul.f32 1.0, %v1574
        %v1576 = vsel %vm1568, %v1569, %v1575
        %vm1577 = vcmask 195584
        %1578 = vst.msk [vmem:[%s712] sm:$0xff] %vm1577, %v1576
        %1579 = vst [vmem:[%s705] sm:$0xff] %v1359
        %1580 = vst [vmem:[%s719] sm:$0xff] %v1450
        %1581 = vst [vmem:[%s726] sm:$0xff] %v1242
        %1582 = vst [vmem:[%s733] sm:$0xff] %v1352
        %s1583 = sand.u32 %s380, 1
        %s1584 = scalar_lea.sflag [#allocation4], %s1583
        %s1585 = sand.u32 %s380, 1
        %s1586 = smul.addr %s1585, 8
        %s1587 = scalar_lea.vmem [#allocation11], %s1586
        %s1588 = sand.u32 %s47, 1
        %s1589 = scalar_lea.sflag [#allocation13], %s1588
        %s1590 = sand.u32 %s406, 1
        %s1591 = smul.addr %s1590, 8
        %s1592 = scalar_lea.vmem [#allocation12], %s1591
        %s1593 = sand.u32 %s47, 1
        %s1594 = scalar_lea.sflag [#allocation13], %s1593
        %s1595 = sand.u32 %s432, 1
        %s1596 = smul.addr %s1595, 8
        %s1597 = scalar_lea.vmem [#allocation14], %s1596
        %s1598 = sand.u32 %s47, 1
        %s1599 = scalar_lea.sflag [#allocation16], %s1598
        %s1600 = sand.u32 %s458, 1
        %s1601 = smul.addr %s1600, 8
        %s1602 = scalar_lea.vmem [#allocation15], %s1601
        %s1603 = sand.u32 %s47, 1
        %s1604 = scalar_lea.sflag [#allocation16], %s1603
        %s1605 = sand.u32 %s484, 1
        %s1606 = smul.addr %s1605, 8
        %s1607 = scalar_lea.vmem [#allocation17], %s1606
        // Predicated region
        $region101: #{tpu_custom_call.1} parent=79 // pred_check
          %p1608 = pneg %p390
        $region102: #{tpu_custom_call.1} parent=79 // pred_check_branch
          %1610 = sbr.rel (%p1608) target = $region104
        $region103: #{tpu_custom_call.1} parent=79 // pred_region
          %s1612 = ssub.s32 128, 128
          %1613 = vsyncadd %s1584, %s1612
          %s1614 = smul.addr %s47, 128
          %s1615 = scalar_lea.hbm %s15, %s1614
          %s1617 = sshll.u32 %s1587, 4
          %s1618 = int_to_ptr.vmem [resolvable:$true] %s1617
          %1620 = dma.vmem_to_hbm [thread:$0]  %s1618, 128, %s1615, %s1584
        $region104: #{tpu_custom_call.1} parent=79 // pred_fallthru
          _
        // Predicated region
        $region105: #{tpu_custom_call.1} parent=79 // pred_check
          %p1621 = pneg %p416
        $region106: #{tpu_custom_call.1} parent=79 // pred_check_branch
          %1623 = sbr.rel (%p1621) target = $region108
        $region107: #{tpu_custom_call.1} parent=79 // pred_region
          %s1625 = ssub.s32 128, 128
          %1626 = vsyncadd %s1589, %s1625
          %s1627 = smul.addr %s47, 128
          %s1628 = scalar_lea.hbm %s16, %s1627
          %s1630 = sshll.u32 %s1592, 4
          %s1631 = int_to_ptr.vmem [resolvable:$true] %s1630
          %1633 = dma.vmem_to_hbm [thread:$0]  %s1631, 128, %s1628, %s1589
        $region108: #{tpu_custom_call.1} parent=79 // pred_fallthru
          _
        // Predicated region
        $region109: #{tpu_custom_call.1} parent=79 // pred_check
          %p1634 = pneg %p442
        $region110: #{tpu_custom_call.1} parent=79 // pred_check_branch
          %1636 = sbr.rel (%p1634) target = $region112
        $region111: #{tpu_custom_call.1} parent=79 // pred_region
          %s1638 = ssub.s32 128, 128
          %1639 = vsyncadd %s1594, %s1638
          %s1640 = smul.addr %s47, 128
          %s1641 = scalar_lea.hbm %s17, %s1640
          %s1643 = sshll.u32 %s1597, 4
          %s1644 = int_to_ptr.vmem [resolvable:$true] %s1643
          %1646 = dma.vmem_to_hbm [thread:$0]  %s1644, 128, %s1641, %s1594
        $region112: #{tpu_custom_call.1} parent=79 // pred_fallthru
          _
        // Predicated region
        $region113: #{tpu_custom_call.1} parent=79 // pred_check
          %p1647 = pneg %p468
        $region114: #{tpu_custom_call.1} parent=79 // pred_check_branch
          %1649 = sbr.rel (%p1647) target = $region116
        $region115: #{tpu_custom_call.1} parent=79 // pred_region
          %s1651 = ssub.s32 128, 128
          %1652 = vsyncadd %s1599, %s1651
          %s1653 = smul.addr %s47, 128
          %s1654 = scalar_lea.hbm %s18, %s1653
          %s1656 = sshll.u32 %s1602, 4
          %s1657 = int_to_ptr.vmem [resolvable:$true] %s1656
          %1659 = dma.vmem_to_hbm [thread:$0]  %s1657, 128, %s1654, %s1599
        $region116: #{tpu_custom_call.1} parent=79 // pred_fallthru
          _
        // Predicated region
        $region117: #{tpu_custom_call.1} parent=79 // pred_check
          %p1660 = pneg %p494
        $region118: #{tpu_custom_call.1} parent=79 // pred_check_branch
          %1662 = sbr.rel (%p1660) target = $region120
        $region119: #{tpu_custom_call.1} parent=79 // pred_region
          %s1664 = ssub.s32 128, 128
          %1665 = vsyncadd %s1604, %s1664
          %s1666 = smul.addr %s47, 128
          %s1667 = scalar_lea.hbm %s19, %s1666
          %s1669 = sshll.u32 %s1607, 4
          %s1670 = int_to_ptr.vmem [resolvable:$true] %s1669
          %1672 = dma.vmem_to_hbm [thread:$0]  %s1670, 128, %s1667, %s1604
        $region120: #{tpu_custom_call.1} parent=79 // pred_fallthru
          _
      $region80: #{tpu_custom_call.1} parent=5 // pred_fallthru
        _
      %p1673 = scmp.le.s32.totalorder 2, %s42
      // Predicated region
      $region121: #{tpu_custom_call.1} parent=5 // pred_check
        %p1674 = pneg %p1673
      $region122: #{tpu_custom_call.1} parent=5 // pred_check_branch
        %1676 = sbr.rel (%p1674) target = $region124
      $region123: #{tpu_custom_call.1} parent=5 // pred_region
        %s1677 = ssub.s32 %s42, 2
        // Predicated region
        $region125: #{tpu_custom_call.1} parent=123 // pred_check
          %p1678 = pneg %p396
        $region126: #{tpu_custom_call.1} parent=123 // pred_check_branch
          %1680 = sbr.rel (%p1678) target = $region128
        $region127: #{tpu_custom_call.1} parent=123 // pred_region
          %s1681 = sand.u32 %s381, 1
          %s1682 = scalar_lea.sflag [#allocation4], %s1681
          %s1683 = sand.u32 %s381, 1
          %s1684 = smul.addr %s1683, 8
          %s1685 = scalar_lea.vmem [#allocation11], %s1684
          %1686 = dma.done %s1682, 128
        $region128: #{tpu_custom_call.1} parent=123 // pred_fallthru
          _
        // Predicated region
        $region129: #{tpu_custom_call.1} parent=123 // pred_check
          %p1687 = pneg %p422
        $region130: #{tpu_custom_call.1} parent=123 // pred_check_branch
          %1689 = sbr.rel (%p1687) target = $region132
        $region131: #{tpu_custom_call.1} parent=123 // pred_region
          %s1690 = sand.u32 %s48, 1
          %s1691 = scalar_lea.sflag [#allocation13], %s1690
          %s1692 = sand.u32 %s407, 1
          %s1693 = smul.addr %s1692, 8
          %s1694 = scalar_lea.vmem [#allocation12], %s1693
          %1695 = dma.done %s1691, 128
        $region132: #{tpu_custom_call.1} parent=123 // pred_fallthru
          _
        // Predicated region
        $region133: #{tpu_custom_call.1} parent=123 // pred_check
          %p1696 = pneg %p448
        $region134: #{tpu_custom_call.1} parent=123 // pred_check_branch
          %1698 = sbr.rel (%p1696) target = $region136
        $region135: #{tpu_custom_call.1} parent=123 // pred_region
          %s1699 = sand.u32 %s48, 1
          %s1700 = scalar_lea.sflag [#allocation13], %s1699
          %s1701 = sand.u32 %s433, 1
          %s1702 = smul.addr %s1701, 8
          %s1703 = scalar_lea.vmem [#allocation14], %s1702
          %1704 = dma.done %s1700, 128
        $region136: #{tpu_custom_call.1} parent=123 // pred_fallthru
          _
        // Predicated region
        $region137: #{tpu_custom_call.1} parent=123 // pred_check
          %p1705 = pneg %p474
        $region138: #{tpu_custom_call.1} parent=123 // pred_check_branch
          %1707 = sbr.rel (%p1705) target = $region140
        $region139: #{tpu_custom_call.1} parent=123 // pred_region
          %s1708 = sand.u32 %s48, 1
          %s1709 = scalar_lea.sflag [#allocation16], %s1708
          %s1710 = sand.u32 %s459, 1
          %s1711 = smul.addr %s1710, 8
          %s1712 = scalar_lea.vmem [#allocation15], %s1711
          %1713 = dma.done %s1709, 128
        $region140: #{tpu_custom_call.1} parent=123 // pred_fallthru
          _
        // Predicated region
        $region141: #{tpu_custom_call.1} parent=123 // pred_check
          %p1714 = pneg %p500
        $region142: #{tpu_custom_call.1} parent=123 // pred_check_branch
          %1716 = sbr.rel (%p1714) target = $region144
        $region143: #{tpu_custom_call.1} parent=123 // pred_region
          %s1717 = sand.u32 %s48, 1
          %s1718 = scalar_lea.sflag [#allocation16], %s1717
          %s1719 = sand.u32 %s485, 1
          %s1720 = smul.addr %s1719, 8
          %s1721 = scalar_lea.vmem [#allocation17], %s1720
          %1722 = dma.done %s1718, 128
        $region144: #{tpu_custom_call.1} parent=123 // pred_fallthru
          _
      $region124: #{tpu_custom_call.1} parent=5 // pred_fallthru
        _
    $region6: #{tpu_custom_call.1} parent=1 // loop_footer
      %s46 = sadd.s32 1, %s42
    $region7: #{tpu_custom_call.1} parent=1 // loop_footer_branch
      %41 = sbr.rel target = $region3
    $region8: #{tpu_custom_call.1} parent=1 // loop_exit
      _
    %1723 = vsyncpa [#allocation3], 1
    %s1724 = scalar_lea.sflag [#allocation3], 1
    %1725 = vsyncpa %s1724, 1
    %1726 = vsyncpa [#allocation6], 1
    %s1727 = scalar_lea.sflag [#allocation6], 1
    %1728 = vsyncpa %s1727, 1
    %1729 = vsyncpa [#allocation9], 1
    %1730 = vsyncpa [#allocation4], 1
    %s1731 = scalar_lea.sflag [#allocation4], 1
    %1732 = vsyncpa %s1731, 1
    %1733 = vsyncpa [#allocation13], 1
    %s1734 = scalar_lea.sflag [#allocation13], 1
    %1735 = vsyncpa %s1734, 1
    %1736 = vsyncpa [#allocation16], 1
    %s1737 = scalar_lea.sflag [#allocation16], 1
    %1738 = vsyncpa %s1737, 1

</llo_original>
